<compile_context>
chip_gen: v5e
topology: v5e:2x2
jax: 0.10.0
libtpu: 0.0.40
codegen_flags: <defaults>
</compile_context>

<pallas_src>
import functools
import math

import jax
import jax.numpy as jnp
from jax.experimental import pallas as pl
from jax.experimental.pallas import tpu as pltpu

# ----------------------------- configuration --------------------------------
B = 2
INP = 8
OUP = 8
H = W = 16
P = H * W                          # 256 -> lane dimension
W_SHIFT = 4                        # log2(W)
assert (1 << W_SHIFT) == W
T1 = (2, 2)
HD2 = INP * T1[0] * T1[1]          # 32
GS1 = (2, 2)
G1, G2 = 2, 2
ACT_MAX_CFG = 2.0
ACT_MAX_EFF = ACT_MAX_CFG * 2.0    # DYShiftMax: self.act_max = act_max * 2
ACT_REDUCTION = 8                  # REDUCTION * ratio
INIT_A = (1.0, 1.0)
INIT_B = (0.0, 0.0)
INIT_AB3 = (1.0, 0.0)
BN_EPS = 1e-5
BN_SCALE = 1.0 / math.sqrt(1.0 + BN_EPS)   # eval-mode BN with default stats


def _make_divisible(v, divisor, min_value=None):
    if min_value is None:
        min_value = divisor
    new_v = max(min_value, int(v + divisor / 2) // divisor * divisor)
    if new_v < 0.9 * v:
        new_v += divisor
    return new_v


def _squeeze_dim(inp, reduction):
    s = _make_divisible(inp // reduction, 4)
    return max(s, 4)


S1 = _squeeze_dim(HD2, ACT_REDUCTION)            # 4 (dys1 / dys2 squeeze)
S3 = _squeeze_dim(OUP, ACT_REDUCTION // 2)       # 4 (dys3 squeeze)
SE_RC = _make_divisible(INP * 0.25, 4)           # 4 (SqueezeExcite reduced ch)


# ---------------- gate-constant slab: one packed (rows, 4) array -------------
def _build_gate_layout():
    fields = {}
    row = 0

    def reg(name, rows, cols):
        nonlocal row
        fields[name] = (row, rows, cols)
        row += -(-rows // 8) * 8          # keep every field 8-row aligned

    for tag, c, s, exp in (("d1", HD2, S1, 4), ("d2", HD2, S1, 4), ("d3", OUP, S3, 2)):
        reg(f"{tag}_w1", c, s)            # fc1^T : (C, S)
        reg(f"{tag}_b1", 1, s)
        reg(f"{tag}_w2", exp * c, s)      # fc2   : (exp*C, S)
        reg(f"{tag}_b2", exp * c, 1)
    reg("se_wr", OUP, SE_RC)
    reg("se_br", 1, SE_RC)
    reg("se_we", OUP, SE_RC)
    reg("se_be", OUP, 1)
    for t in range(3):                    # depthwise (3,1) taps, per-channel
        reg(f"wv{t}", HD2, 1)
    for t in range(3):                    # depthwise (1,3) taps, per-channel
        reg(f"wh{t}", HD2, 1)
    return fields, row


_GATE_FIELDS, _GATE_ROWS = _build_gate_layout()
GATE_COLS = max(S1, S3, SE_RC)


def _pack_gates(values):
    g = jnp.zeros((_GATE_ROWS, GATE_COLS), jnp.float32)
    for name, val in values.items():
        r0, rows, cols = _GATE_FIELDS[name]
        assert val.shape == (rows, cols), (name, val.shape, (rows, cols))
        g = g.at[r0:r0 + rows, 0:cols].set(val)
    return g


# ------------------------------ fused kernel --------------------------------
def _block_kernel(x_ref, w1s_ref, pm2_ref, w2s_ref, g_ref, o_ref, *, inv_p, act_max):
    mm = functools.partial(jnp.dot, preferred_element_type=jnp.float32)

    def h_sig(v):
        return jnp.clip(v + 3.0, 0.0, 6.0) * (1.0 / 6.0)

    def gate(name):
        r0, rows, cols = _GATE_FIELDS[name]
        return g_ref[pl.ds(r0, rows), pl.ds(0, cols)]

    def dy_shift_max(h, x2, tag, exp, init_a, init_b):
        c = h.shape[0]
        pooled = jnp.sum(h, axis=1, keepdims=True) * inv_p               # (C, 1)
        # tiny FC chain on the VPU: broadcast-mul + reduce
        hid = jnp.maximum(
            jnp.sum(gate(tag + "_w1") * pooled, axis=0, keepdims=True)
            + gate(tag + "_b1"), 0.0)                                    # (1, S)
        y = jnp.sum(gate(tag + "_w2") * hid, axis=1, keepdims=True) \
            + gate(tag + "_b2")                                          # (exp*C, 1)
        y = (h_sig(y) - 0.5) * act_max
        out = h * (y[0:c] + init_a[0]) + x2 * (y[c:2 * c] + init_b[0])
        if exp == 4:
            out = jnp.maximum(
                out, h * (y[2 * c:3 * c] + init_a[1]) + x2 * (y[3 * c:4 * c] + init_b[1]))
        return out

    x = x_ref[0]                                                         # (INP, P)

    # Border masks (realize the zero padding of the depthwise conv) from an
    # in-kernel lane iota; W is a power of two so //, % become shift / and.
    p_idx = jax.lax.broadcasted_iota(jnp.int32, (1, P), 1)
    hi = p_idx >> W_SHIFT
    wi = p_idx & (W - 1)
    m_up = jnp.where(hi >= 1, 1.0, 0.0)
    m_dn = jnp.where(hi <= H - 2, 1.0, 0.0)
    m_lf = jnp.where(wi >= 1, 1.0, 0.0)
    m_rt = jnp.where(wi <= W - 2, 1.0, 0.0)

    # 1+2) grouped 1x1 conv 8->32 (+folded BN) with the DYShiftMax#1 channel
    #      permutation folded into rows 32:64 -> h and x2 from one MXU matmul.
    hx = mm(w1s_ref[...], x)                                             # (64, P)
    h = dy_shift_max(hx[0:HD2], hx[HD2:2 * HD2], "d1", 4, INIT_A, INIT_B)

    # 3) DepthSpatialSepConv: per-channel (3,1) over H then (1,3) over W.
    #    Neighbours via XLU lane rolls (flat P axis), zero padding via masks.
    h_up = pltpu.roll(h, shift=W, axis=1) * m_up                         # x[h-1, w]
    h_dn = pltpu.roll(h, shift=P - W, axis=1) * m_dn                     # x[h+1, w]
    t = gate("wv0") * h_up + gate("wv1") * h + gate("wv2") * h_dn
    t_lf = pltpu.roll(t, shift=1, axis=1) * m_lf                         # t[h, w-1]
    t_rt = pltpu.roll(t, shift=P - 1, axis=1) * m_rt                     # t[h, w+1]
    h = gate("wh0") * t_lf + gate("wh1") * t + gate("wh2") * t_rt

    # 4) DYShiftMax #2 (expansion=True -> g=16); input is the depthwise output,
    #    so its channel permutation stays a small (32,32)@(32,P) matmul.
    h = dy_shift_max(h, mm(pm2_ref[...], h), "d2", 4, INIT_A, INIT_B)

    # 5+6+7) grouped 1x1 conv 32->8 (+folded BN, ChannelShuffle2 folded into the
    #        columns, DYShiftMax#3 permutation folded into rows 8:16).
    hx = mm(w2s_ref[...], h)                                             # (16, P)
    h = dy_shift_max(hx[0:OUP], hx[OUP:2 * OUP], "d3", 2,
                     (INIT_AB3[0], 0.0), (INIT_AB3[1], 0.0))

    # 8) SqueezeExcite gate + identity residual (stride==1 and inp==oup)
    pooled = jnp.sum(h, axis=1, keepdims=True) * inv_p                   # (8, 1)
    r = jnp.maximum(
        jnp.sum(gate("se_wr") * pooled, axis=0, keepdims=True) + gate("se_br"), 0.0)
    e = jnp.sum(gate("se_we") * r, axis=1, keepdims=True) + gate("se_be")
    o_ref[0] = h * h_sig(e) + x


# ------------------------------ parameter init ------------------------------
def _dys_index(inp, g):
    gc = inp // g
    return [((j + 1) % g) * gc + ((k + 1) % gc) for j in range(g) for k in range(gc)]


def _perm_matrix(idx, c):
    # x2[o, :] = x[idx[o], :]  <=>  x2 = PM @ x  with  PM[o, idx[o]] = 1
    return jnp.zeros((c, c), jnp.float32).at[
        jnp.arange(c), jnp.array(idx, jnp.int32)].set(1.0)


def _block_diag(key, cout, cin, groups):
    go, gi = cout // groups, cin // groups
    ws = jax.random.normal(key, (groups, go, gi), jnp.float32) * 0.3
    w = jnp.zeros((cout, cin), jnp.float32)
    for g in range(groups):
        w = w.at[g * go:(g + 1) * go, g * gi:(g + 1) * gi].set(ws[g])
    return w


def _init_dys_fc(key, c, squeeze, exp):
    k1, k2, k3, k4 = jax.random.split(key, 4)
    return dict(
        w1=jax.random.normal(k1, (c, squeeze), jnp.float32) * 0.3,
        b1=jax.random.normal(k2, (1, squeeze), jnp.float32) * 0.1,
        w2=jax.random.normal(k3, (exp * c, squeeze), jnp.float32) * 0.3,
        b2=jax.random.normal(k4, (exp * c, 1), jnp.float32) * 0.1)


# ChannelShuffle2 convention kept identical to the previously accepted version:
#   out channel o <- in channel (o % 2) * (HD2 // 2) + o // 2   (folded into w_pw2)
CS2_IDX = jnp.array([(o % 2) * (HD2 // 2) + o // 2 for o in range(HD2)], jnp.int32)


def init_params(key):
    ks = jax.random.split(key, 11)

    # GroupConv 8 -> 32 (g=2) + folded BN; DYShiftMax#1 permutation folded in.
    w_pw1 = _block_diag(ks[0], HD2, INP, GS1[0]) * BN_SCALE
    pm1 = _perm_matrix(_dys_index(HD2, GS1[1]), HD2)
    w_pw1s = jnp.concatenate([w_pw1, pm1 @ w_pw1], axis=0)               # (64, 8)

    dys1 = _init_dys_fc(ks[1], HD2, S1, 4)

    # DepthSpatialSepConv(32, (1,1), 3, 1): per-channel taps, BN scale folded,
    # zero BN biases dropped.
    wv = jax.random.normal(ks[2], (3, HD2), jnp.float32) * 0.3 * BN_SCALE
    wh = jax.random.normal(ks[3], (3, HD2), jnp.float32) * 0.3 * BN_SCALE

    # DYShiftMax #2: c=32, exp=4, expansion=True -> g = 32 // gs1[1] = 16
    dys2 = _init_dys_fc(ks[4], HD2, S1, 4)
    pm2 = _perm_matrix(_dys_index(HD2, HD2 // GS1[1]), HD2)              # (32, 32)

    # GroupConv 32 -> 8 (g=2) + folded BN, ChannelShuffle2 folded into columns,
    # DYShiftMax#3 permutation folded into extra output rows.
    w2 = _block_diag(ks[5], OUP, HD2, G1) * BN_SCALE
    w_pw2 = jnp.zeros_like(w2).at[:, CS2_IDX].set(w2)
    pm3 = _perm_matrix(_dys_index(OUP, G2), OUP)
    w_pw2s = jnp.concatenate([w_pw2, pm3 @ w_pw2], axis=0)               # (16, 32)

    dys3 = _init_dys_fc(ks[6], OUP, S3, 2)

    # SqueezeExcite(8): reduced channels = _make_divisible(8*0.25, 4) = 4
    se_wr = jax.random.normal(ks[7], (OUP, SE_RC), jnp.float32) * 0.3    # fc1^T
    se_br = jax.random.normal(ks[8], (1, SE_RC), jnp.float32) * 0.1
    se_we = jax.random.normal(ks[9], (OUP, SE_RC), jnp.float32) * 0.3    # fc2
    se_be = jax.random.normal(ks[10], (OUP, 1), jnp.float32) * 0.1

    fields = {}
    for tag, d in (("d1", dys1), ("d2", dys2), ("d3", dys3)):
        for k, v in d.items():
            fields[f"{tag}_{k}"] = v
    fields.update(se_wr=se_wr, se_br=se_br, se_we=se_we, se_be=se_be)
    for t in range(3):
        fields[f"wv{t}"] = wv[t][:, None]
        fields[f"wh{t}"] = wh[t][:, None]

    return dict(w_pw1s=w_pw1s, pm2=pm2, w_pw2s=w_pw2s, gates=_pack_gates(fields))


# ------------------------------ full forward --------------------------------
def dymicro_block(x_nchw, p):
    bn, c, hh, ww = x_nchw.shape
    assert (c, hh, ww) == (INP, H, W)
    pn = hh * ww
    x = x_nchw.reshape(bn, c, pn)          # NCHW -> (B, C, P): pure view

    kern = functools.partial(_block_kernel, inv_p=1.0 / pn, act_max=ACT_MAX_EFF)
    out = pl.pallas_call(
        kern,
        out_shape=jax.ShapeDtypeStruct((bn, OUP, pn), jnp.float32),
        grid_spec=pltpu.PrefetchScalarGridSpec(
            num_scalar_prefetch=0,
            grid=(bn,),
            in_specs=[
                pl.BlockSpec((1, INP, pn), lambda b: (b, 0, 0)),          # x
                pl.BlockSpec((2 * HD2, INP), lambda b: (0, 0)),           # pw1 (+pm1)
                pl.BlockSpec((HD2, HD2), lambda b: (0, 0)),               # pm2
                pl.BlockSpec((2 * OUP, HD2), lambda b: (0, 0)),           # pw2 (+pm3)
                pl.BlockSpec((_GATE_ROWS, GATE_COLS), lambda b: (0, 0)),  # gate slab
            ],
            out_specs=pl.BlockSpec((1, OUP, pn), lambda b: (b, 0, 0))),
        compiler_params=pltpu.CompilerParams(
            dimension_semantics=("parallel",)),    # one batch element per TC on v7x
    )(x, p["w_pw1s"], p["pm2"], p["w_pw2s"], p["gates"])
    return out.reshape(bn, OUP, hh, ww)    # (B, C, P) -> NCHW: pure view


if __name__ == "__main__":
    key = jax.random.PRNGKey(0)
    kx, kp = jax.random.split(key)
    x = jax.random.normal(kx, (B, INP, H, W), dtype=jnp.float32)
    params = init_params(kp)
    out = jax.block_until_ready(dymicro_block(x, params))
    assert out.shape == (B, OUP, H, W)
    assert bool(jnp.all(jnp.isfinite(out)))
    print("KERNEL_OK")
</pallas_src>

<mosaic_0001>
module attributes {stable_mosaic.version = 11 : i64} {
  func.func @_block_kernel(%arg0: i32, %arg1: memref<1x8x256xf32, #tpu.memory_space<vmem>>, %arg2: memref<64x8xf32, #tpu.memory_space<vmem>>, %arg3: memref<32x32xf32, #tpu.memory_space<vmem>>, %arg4: memref<16x32xf32, #tpu.memory_space<vmem>>, %arg5: memref<864x4xf32, #tpu.memory_space<vmem>>, %arg6: memref<1x8x256xf32, #tpu.memory_space<vmem>>) attributes {dimension_semantics = [#tpu.dimension_semantics<parallel>], iteration_bounds = array<i64: 2>, scalar_prefetch = 0 : i64, scratch_operands = 0 : i64, tpu.core_type = #tpu.core_type<tc>, window_params = [{transform_indices = @transform_0, window_bounds = array<i64: 1, 8, 256>}, {pipeline_mode = #tpu.pipeline_mode<synchronous>, transform_indices = @transform_1, window_bounds = array<i64: 64, 8>}, {pipeline_mode = #tpu.pipeline_mode<synchronous>, transform_indices = @transform_2, window_bounds = array<i64: 32, 32>}, {pipeline_mode = #tpu.pipeline_mode<synchronous>, transform_indices = @transform_3, window_bounds = array<i64: 16, 32>}, {pipeline_mode = #tpu.pipeline_mode<synchronous>, transform_indices = @transform_4, window_bounds = array<i64: 864, 4>}, {transform_indices = @transform_5, window_bounds = array<i64: 1, 8, 256>}]} {
    %c0 = arith.constant 0 : index
    %c0_0 = arith.constant 0 : index
    %c0_1 = arith.constant 0 : index
    %0 = vector.load %arg1[%c0, %c0_0, %c0_1] : memref<1x8x256xf32, #tpu.memory_space<vmem>>, vector<1x8x256xf32>
    %1 = vector.shape_cast %0 : vector<1x8x256xf32> to vector<8x256xf32>
    %2 = tpu.iota {dimensions = array<i32: 1>} : vector<1x256xi32>
    %c4_i32 = arith.constant 4 : i32
    %3 = vector.broadcast %c4_i32 : i32 to vector<1x256xi32>
    %4 = arith.shrsi %2, %3 : vector<1x256xi32>
    %c15_i32 = arith.constant 15 : i32
    %5 = vector.broadcast %c15_i32 : i32 to vector<1x256xi32>
    %6 = arith.andi %2, %5 : vector<1x256xi32>
    %c1_i32 = arith.constant 1 : i32
    %7 = vector.broadcast %c1_i32 : i32 to vector<1x256xi32>
    %8 = arith.cmpi sge, %4, %7 : vector<1x256xi32>
    %cst = arith.constant 1.000000e+00 : f32
    %cst_2 = arith.constant 0.000000e+00 : f32
    %9 = vector.broadcast %cst : f32 to vector<1x256xf32>
    %10 = vector.broadcast %cst_2 : f32 to vector<1x256xf32>
    %11 = arith.select %8, %9, %10 : vector<1x256xi1>, vector<1x256xf32>
    %c14_i32 = arith.constant 14 : i32
    %12 = vector.broadcast %c14_i32 : i32 to vector<1x256xi32>
    %13 = arith.cmpi sle, %4, %12 : vector<1x256xi32>
    %cst_3 = arith.constant 1.000000e+00 : f32
    %cst_4 = arith.constant 0.000000e+00 : f32
    %14 = vector.broadcast %cst_3 : f32 to vector<1x256xf32>
    %15 = vector.broadcast %cst_4 : f32 to vector<1x256xf32>
    %16 = arith.select %13, %14, %15 : vector<1x256xi1>, vector<1x256xf32>
    %c1_i32_5 = arith.constant 1 : i32
    %17 = vector.broadcast %c1_i32_5 : i32 to vector<1x256xi32>
    %18 = arith.cmpi sge, %6, %17 : vector<1x256xi32>
    %cst_6 = arith.constant 1.000000e+00 : f32
    %cst_7 = arith.constant 0.000000e+00 : f32
    %19 = vector.broadcast %cst_6 : f32 to vector<1x256xf32>
    %20 = vector.broadcast %cst_7 : f32 to vector<1x256xf32>
    %21 = arith.select %18, %19, %20 : vector<1x256xi1>, vector<1x256xf32>
    %c14_i32_8 = arith.constant 14 : i32
    %22 = vector.broadcast %c14_i32_8 : i32 to vector<1x256xi32>
    %23 = arith.cmpi sle, %6, %22 : vector<1x256xi32>
    %cst_9 = arith.constant 1.000000e+00 : f32
    %cst_10 = arith.constant 0.000000e+00 : f32
    %24 = vector.broadcast %cst_9 : f32 to vector<1x256xf32>
    %25 = vector.broadcast %cst_10 : f32 to vector<1x256xf32>
    %26 = arith.select %23, %24, %25 : vector<1x256xi1>, vector<1x256xf32>
    %c0_11 = arith.constant 0 : index
    %c0_12 = arith.constant 0 : index
    %27 = vector.load %arg2[%c0_11, %c0_12] : memref<64x8xf32, #tpu.memory_space<vmem>>, vector<64x8xf32>
    %cst_13 = arith.constant dense<0.000000e+00> : vector<64x256xf32>
    %28 = tpu.matmul %27, %1, %cst_13 {dimension_numbers = #tpu.dot_dimension_numbers<[1], [0], [0], [1], [0, 0, 1, 1], [], []>} : vector<64x8xf32>, vector<8x256xf32>, vector<64x256xf32> -> vector<64x256xf32>
    %29 = vector.extract_strided_slice %28 {offsets = [0, 0], sizes = [32, 256], strides = [1, 1]} : vector<64x256xf32> to vector<32x256xf32>
    %30 = vector.extract_strided_slice %28 {offsets = [32, 0], sizes = [32, 256], strides = [1, 1]} : vector<64x256xf32> to vector<32x256xf32>
    %cst_14 = arith.constant dense<0.000000e+00> : vector<32xf32>
    %31 = vector.multi_reduction <add>, %29, %cst_14 [1] : vector<32x256xf32> to vector<32xf32>
    %32 = vector.shape_cast %31 : vector<32xf32> to vector<32x1xf32>
    %cst_15 = arith.constant 3.906250e-03 : f32
    %33 = vector.broadcast %cst_15 : f32 to vector<32x1xf32>
    %34 = arith.mulf %32, %33 : vector<32x1xf32>
    %c0_16 = arith.constant 0 : index
    %c0_17 = arith.constant 0 : index
    %35 = vector.load %arg5[%c0_16, %c0_17] : memref<864x4xf32, #tpu.memory_space<vmem>>, vector<32x4xf32>
    %36 = vector.broadcast %34 : vector<32x1xf32> to vector<32x4xf32>
    %37 = arith.mulf %35, %36 : vector<32x4xf32>
    %cst_18 = arith.constant dense<0.000000e+00> : vector<4xf32>
    %38 = vector.multi_reduction <add>, %37, %cst_18 [0] : vector<32x4xf32> to vector<4xf32>
    %39 = vector.shape_cast %38 : vector<4xf32> to vector<1x4xf32>
    %c32 = arith.constant 32 : index
    %c0_19 = arith.constant 0 : index
    %40 = vector.load %arg5[%c32, %c0_19] : memref<864x4xf32, #tpu.memory_space<vmem>>, vector<1x4xf32>
    %41 = arith.addf %39, %40 : vector<1x4xf32>
    %cst_20 = arith.constant 0.000000e+00 : f32
    %42 = vector.broadcast %cst_20 : f32 to vector<1x4xf32>
    %43 = arith.maximumf %41, %42 : vector<1x4xf32>
    %c40 = arith.constant 40 : index
    %c0_21 = arith.constant 0 : index
    %44 = vector.load %arg5[%c40, %c0_21] : memref<864x4xf32, #tpu.memory_space<vmem>>, vector<128x4xf32>
    %45 = vector.broadcast %43 : vector<1x4xf32> to vector<128x4xf32>
    %46 = arith.mulf %44, %45 : vector<128x4xf32>
    %cst_22 = arith.constant dense<0.000000e+00> : vector<128xf32>
    %47 = vector.multi_reduction <add>, %46, %cst_22 [1] : vector<128x4xf32> to vector<128xf32>
    %48 = vector.shape_cast %47 : vector<128xf32> to vector<128x1xf32>
    %c168 = arith.constant 168 : index
    %c0_23 = arith.constant 0 : index
    %49 = vector.load %arg5[%c168, %c0_23] : memref<864x4xf32, #tpu.memory_space<vmem>>, vector<128x1xf32>
    %50 = arith.addf %48, %49 : vector<128x1xf32>
    %cst_24 = arith.constant 3.000000e+00 : f32
    %51 = vector.broadcast %cst_24 : f32 to vector<128x1xf32>
    %52 = arith.addf %50, %51 : vector<128x1xf32>
    %cst_25 = arith.constant 0.000000e+00 : f32
    %cst_26 = arith.constant 6.000000e+00 : f32
    %53 = vector.broadcast %cst_25 : f32 to vector<128x1xf32>
    %54 = arith.maximumf %53, %52 : vector<128x1xf32>
    %55 = vector.broadcast %cst_26 : f32 to vector<128x1xf32>
    %56 = arith.minimumf %55, %54 : vector<128x1xf32>
    %cst_27 = arith.constant 0.166666672 : f32
    %57 = vector.broadcast %cst_27 : f32 to vector<128x1xf32>
    %58 = arith.mulf %56, %57 : vector<128x1xf32>
    %cst_28 = arith.constant 5.000000e-01 : f32
    %59 = vector.broadcast %cst_28 : f32 to vector<128x1xf32>
    %60 = arith.subf %58, %59 : vector<128x1xf32>
    %cst_29 = arith.constant 4.000000e+00 : f32
    %61 = vector.broadcast %cst_29 : f32 to vector<128x1xf32>
    %62 = arith.mulf %60, %61 : vector<128x1xf32>
    %63 = vector.extract_strided_slice %62 {offsets = [0, 0], sizes = [32, 1], strides = [1, 1]} : vector<128x1xf32> to vector<32x1xf32>
    %cst_30 = arith.constant 1.000000e+00 : f32
    %64 = vector.broadcast %cst_30 : f32 to vector<32x1xf32>
    %65 = arith.addf %63, %64 : vector<32x1xf32>
    %66 = vector.broadcast %65 : vector<32x1xf32> to vector<32x256xf32>
    %67 = arith.mulf %29, %66 : vector<32x256xf32>
    %68 = vector.extract_strided_slice %62 {offsets = [32, 0], sizes = [32, 1], strides = [1, 1]} : vector<128x1xf32> to vector<32x1xf32>
    %cst_31 = arith.constant 0.000000e+00 : f32
    %69 = vector.broadcast %cst_31 : f32 to vector<32x1xf32>
    %70 = arith.addf %68, %69 : vector<32x1xf32>
    %71 = vector.broadcast %70 : vector<32x1xf32> to vector<32x256xf32>
    %72 = arith.mulf %30, %71 : vector<32x256xf32>
    %73 = arith.addf %67, %72 : vector<32x256xf32>
    %74 = vector.extract_strided_slice %62 {offsets = [64, 0], sizes = [32, 1], strides = [1, 1]} : vector<128x1xf32> to vector<32x1xf32>
    %cst_32 = arith.constant 1.000000e+00 : f32
    %75 = vector.broadcast %cst_32 : f32 to vector<32x1xf32>
    %76 = arith.addf %74, %75 : vector<32x1xf32>
    %77 = vector.broadcast %76 : vector<32x1xf32> to vector<32x256xf32>
    %78 = arith.mulf %29, %77 : vector<32x256xf32>
    %79 = vector.extract_strided_slice %62 {offsets = [96, 0], sizes = [32, 1], strides = [1, 1]} : vector<128x1xf32> to vector<32x1xf32>
    %cst_33 = arith.constant 0.000000e+00 : f32
    %80 = vector.broadcast %cst_33 : f32 to vector<32x1xf32>
    %81 = arith.addf %79, %80 : vector<32x1xf32>
    %82 = vector.broadcast %81 : vector<32x1xf32> to vector<32x256xf32>
    %83 = arith.mulf %30, %82 : vector<32x256xf32>
    %84 = arith.addf %78, %83 : vector<32x256xf32>
    %85 = arith.maximumf %73, %84 : vector<32x256xf32>
    %c16_i32 = arith.constant 16 : i32
    %86 = tpu.dynamic_rotate %85 by %c16_i32 dim 1 : vector<32x256xf32>, i32 -> vector<32x256xf32>
    %87 = vector.broadcast %11 : vector<1x256xf32> to vector<32x256xf32>
    %88 = arith.mulf %86, %87 : vector<32x256xf32>
    %c240_i32 = arith.constant 240 : i32
    %89 = tpu.dynamic_rotate %85 by %c240_i32 dim 1 : vector<32x256xf32>, i32 -> vector<32x256xf32>
    %90 = vector.broadcast %16 : vector<1x256xf32> to vector<32x256xf32>
    %91 = arith.mulf %89, %90 : vector<32x256xf32>
    %c672 = arith.constant 672 : index
    %c0_34 = arith.constant 0 : index
    %92 = vector.load %arg5[%c672, %c0_34] : memref<864x4xf32, #tpu.memory_space<vmem>>, vector<32x1xf32>
    %93 = vector.broadcast %92 : vector<32x1xf32> to vector<32x256xf32>
    %94 = arith.mulf %93, %88 : vector<32x256xf32>
    %c704 = arith.constant 704 : index
    %c0_35 = arith.constant 0 : index
    %95 = vector.load %arg5[%c704, %c0_35] : memref<864x4xf32, #tpu.memory_space<vmem>>, vector<32x1xf32>
    %96 = vector.broadcast %95 : vector<32x1xf32> to vector<32x256xf32>
    %97 = arith.mulf %96, %85 : vector<32x256xf32>
    %98 = arith.addf %94, %97 : vector<32x256xf32>
    %c736 = arith.constant 736 : index
    %c0_36 = arith.constant 0 : index
    %99 = vector.load %arg5[%c736, %c0_36] : memref<864x4xf32, #tpu.memory_space<vmem>>, vector<32x1xf32>
    %100 = vector.broadcast %99 : vector<32x1xf32> to vector<32x256xf32>
    %101 = arith.mulf %100, %91 : vector<32x256xf32>
    %102 = arith.addf %98, %101 : vector<32x256xf32>
    %c1_i32_37 = arith.constant 1 : i32
    %103 = tpu.dynamic_rotate %102 by %c1_i32_37 dim 1 : vector<32x256xf32>, i32 -> vector<32x256xf32>
    %104 = vector.broadcast %21 : vector<1x256xf32> to vector<32x256xf32>
    %105 = arith.mulf %103, %104 : vector<32x256xf32>
    %c255_i32 = arith.constant 255 : i32
    %106 = tpu.dynamic_rotate %102 by %c255_i32 dim 1 : vector<32x256xf32>, i32 -> vector<32x256xf32>
    %107 = vector.broadcast %26 : vector<1x256xf32> to vector<32x256xf32>
    %108 = arith.mulf %106, %107 : vector<32x256xf32>
    %c768 = arith.constant 768 : index
    %c0_38 = arith.constant 0 : index
    %109 = vector.load %arg5[%c768, %c0_38] : memref<864x4xf32, #tpu.memory_space<vmem>>, vector<32x1xf32>
    %110 = vector.broadcast %109 : vector<32x1xf32> to vector<32x256xf32>
    %111 = arith.mulf %110, %105 : vector<32x256xf32>
    %c800 = arith.constant 800 : index
    %c0_39 = arith.constant 0 : index
    %112 = vector.load %arg5[%c800, %c0_39] : memref<864x4xf32, #tpu.memory_space<vmem>>, vector<32x1xf32>
    %113 = vector.broadcast %112 : vector<32x1xf32> to vector<32x256xf32>
    %114 = arith.mulf %113, %102 : vector<32x256xf32>
    %115 = arith.addf %111, %114 : vector<32x256xf32>
    %c832 = arith.constant 832 : index
    %c0_40 = arith.constant 0 : index
    %116 = vector.load %arg5[%c832, %c0_40] : memref<864x4xf32, #tpu.memory_space<vmem>>, vector<32x1xf32>
    %117 = vector.broadcast %116 : vector<32x1xf32> to vector<32x256xf32>
    %118 = arith.mulf %117, %108 : vector<32x256xf32>
    %119 = arith.addf %115, %118 : vector<32x256xf32>
    %c0_41 = arith.constant 0 : index
    %c0_42 = arith.constant 0 : index
    %120 = vector.load %arg3[%c0_41, %c0_42] : memref<32x32xf32, #tpu.memory_space<vmem>>, vector<32x32xf32>
    %cst_43 = arith.constant dense<0.000000e+00> : vector<32x256xf32>
    %121 = tpu.matmul %120, %119, %cst_43 {dimension_numbers = #tpu.dot_dimension_numbers<[1], [0], [0], [1], [0, 0, 1, 1], [], []>} : vector<32x32xf32>, vector<32x256xf32>, vector<32x256xf32> -> vector<32x256xf32>
    %cst_44 = arith.constant dense<0.000000e+00> : vector<32xf32>
    %122 = vector.multi_reduction <add>, %119, %cst_44 [1] : vector<32x256xf32> to vector<32xf32>
    %123 = vector.shape_cast %122 : vector<32xf32> to vector<32x1xf32>
    %cst_45 = arith.constant 3.906250e-03 : f32
    %124 = vector.broadcast %cst_45 : f32 to vector<32x1xf32>
    %125 = arith.mulf %123, %124 : vector<32x1xf32>
    %c296 = arith.constant 296 : index
    %c0_46 = arith.constant 0 : index
    %126 = vector.load %arg5[%c296, %c0_46] : memref<864x4xf32, #tpu.memory_space<vmem>>, vector<32x4xf32>
    %127 = vector.broadcast %125 : vector<32x1xf32> to vector<32x4xf32>
    %128 = arith.mulf %126, %127 : vector<32x4xf32>
    %cst_47 = arith.constant dense<0.000000e+00> : vector<4xf32>
    %129 = vector.multi_reduction <add>, %128, %cst_47 [0] : vector<32x4xf32> to vector<4xf32>
    %130 = vector.shape_cast %129 : vector<4xf32> to vector<1x4xf32>
    %c328 = arith.constant 328 : index
    %c0_48 = arith.constant 0 : index
    %131 = vector.load %arg5[%c328, %c0_48] : memref<864x4xf32, #tpu.memory_space<vmem>>, vector<1x4xf32>
    %132 = arith.addf %130, %131 : vector<1x4xf32>
    %cst_49 = arith.constant 0.000000e+00 : f32
    %133 = vector.broadcast %cst_49 : f32 to vector<1x4xf32>
    %134 = arith.maximumf %132, %133 : vector<1x4xf32>
    %c336 = arith.constant 336 : index
    %c0_50 = arith.constant 0 : index
    %135 = vector.load %arg5[%c336, %c0_50] : memref<864x4xf32, #tpu.memory_space<vmem>>, vector<128x4xf32>
    %136 = vector.broadcast %134 : vector<1x4xf32> to vector<128x4xf32>
    %137 = arith.mulf %135, %136 : vector<128x4xf32>
    %cst_51 = arith.constant dense<0.000000e+00> : vector<128xf32>
    %138 = vector.multi_reduction <add>, %137, %cst_51 [1] : vector<128x4xf32> to vector<128xf32>
    %139 = vector.shape_cast %138 : vector<128xf32> to vector<128x1xf32>
    %c464 = arith.constant 464 : index
    %c0_52 = arith.constant 0 : index
    %140 = vector.load %arg5[%c464, %c0_52] : memref<864x4xf32, #tpu.memory_space<vmem>>, vector<128x1xf32>
    %141 = arith.addf %139, %140 : vector<128x1xf32>
    %cst_53 = arith.constant 3.000000e+00 : f32
    %142 = vector.broadcast %cst_53 : f32 to vector<128x1xf32>
    %143 = arith.addf %141, %142 : vector<128x1xf32>
    %cst_54 = arith.constant 0.000000e+00 : f32
    %cst_55 = arith.constant 6.000000e+00 : f32
    %144 = vector.broadcast %cst_54 : f32 to vector<128x1xf32>
    %145 = arith.maximumf %144, %143 : vector<128x1xf32>
    %146 = vector.broadcast %cst_55 : f32 to vector<128x1xf32>
    %147 = arith.minimumf %146, %145 : vector<128x1xf32>
    %cst_56 = arith.constant 0.166666672 : f32
    %148 = vector.broadcast %cst_56 : f32 to vector<128x1xf32>
    %149 = arith.mulf %147, %148 : vector<128x1xf32>
    %cst_57 = arith.constant 5.000000e-01 : f32
    %150 = vector.broadcast %cst_57 : f32 to vector<128x1xf32>
    %151 = arith.subf %149, %150 : vector<128x1xf32>
    %cst_58 = arith.constant 4.000000e+00 : f32
    %152 = vector.broadcast %cst_58 : f32 to vector<128x1xf32>
    %153 = arith.mulf %151, %152 : vector<128x1xf32>
    %154 = vector.extract_strided_slice %153 {offsets = [0, 0], sizes = [32, 1], strides = [1, 1]} : vector<128x1xf32> to vector<32x1xf32>
    %cst_59 = arith.constant 1.000000e+00 : f32
    %155 = vector.broadcast %cst_59 : f32 to vector<32x1xf32>
    %156 = arith.addf %154, %155 : vector<32x1xf32>
    %157 = vector.broadcast %156 : vector<32x1xf32> to vector<32x256xf32>
    %158 = arith.mulf %119, %157 : vector<32x256xf32>
    %159 = vector.extract_strided_slice %153 {offsets = [32, 0], sizes = [32, 1], strides = [1, 1]} : vector<128x1xf32> to vector<32x1xf32>
    %cst_60 = arith.constant 0.000000e+00 : f32
    %160 = vector.broadcast %cst_60 : f32 to vector<32x1xf32>
    %161 = arith.addf %159, %160 : vector<32x1xf32>
    %162 = vector.broadcast %161 : vector<32x1xf32> to vector<32x256xf32>
    %163 = arith.mulf %121, %162 : vector<32x256xf32>
    %164 = arith.addf %158, %163 : vector<32x256xf32>
    %165 = vector.extract_strided_slice %153 {offsets = [64, 0], sizes = [32, 1], strides = [1, 1]} : vector<128x1xf32> to vector<32x1xf32>
    %cst_61 = arith.constant 1.000000e+00 : f32
    %166 = vector.broadcast %cst_61 : f32 to vector<32x1xf32>
    %167 = arith.addf %165, %166 : vector<32x1xf32>
    %168 = vector.broadcast %167 : vector<32x1xf32> to vector<32x256xf32>
    %169 = arith.mulf %119, %168 : vector<32x256xf32>
    %170 = vector.extract_strided_slice %153 {offsets = [96, 0], sizes = [32, 1], strides = [1, 1]} : vector<128x1xf32> to vector<32x1xf32>
    %cst_62 = arith.constant 0.000000e+00 : f32
    %171 = vector.broadcast %cst_62 : f32 to vector<32x1xf32>
    %172 = arith.addf %170, %171 : vector<32x1xf32>
    %173 = vector.broadcast %172 : vector<32x1xf32> to vector<32x256xf32>
    %174 = arith.mulf %121, %173 : vector<32x256xf32>
    %175 = arith.addf %169, %174 : vector<32x256xf32>
    %176 = arith.maximumf %164, %175 : vector<32x256xf32>
    %c0_63 = arith.constant 0 : index
    %c0_64 = arith.constant 0 : index
    %177 = vector.load %arg4[%c0_63, %c0_64] : memref<16x32xf32, #tpu.memory_space<vmem>>, vector<16x32xf32>
    %cst_65 = arith.constant dense<0.000000e+00> : vector<16x256xf32>
    %178 = tpu.matmul %177, %176, %cst_65 {dimension_numbers = #tpu.dot_dimension_numbers<[1], [0], [0], [1], [0, 0, 1, 1], [], []>} : vector<16x32xf32>, vector<32x256xf32>, vector<16x256xf32> -> vector<16x256xf32>
    %179 = vector.extract_strided_slice %178 {offsets = [0, 0], sizes = [8, 256], strides = [1, 1]} : vector<16x256xf32> to vector<8x256xf32>
    %180 = vector.extract_strided_slice %178 {offsets = [8, 0], sizes = [8, 256], strides = [1, 1]} : vector<16x256xf32> to vector<8x256xf32>
    %cst_66 = arith.constant dense<0.000000e+00> : vector<8xf32>
    %181 = vector.multi_reduction <add>, %179, %cst_66 [1] : vector<8x256xf32> to vector<8xf32>
    %182 = vector.shape_cast %181 : vector<8xf32> to vector<8x1xf32>
    %cst_67 = arith.constant 3.906250e-03 : f32
    %183 = vector.broadcast %cst_67 : f32 to vector<8x1xf32>
    %184 = arith.mulf %182, %183 : vector<8x1xf32>
    %c592 = arith.constant 592 : index
    %c0_68 = arith.constant 0 : index
    %185 = vector.load %arg5[%c592, %c0_68] : memref<864x4xf32, #tpu.memory_space<vmem>>, vector<8x4xf32>
    %186 = vector.broadcast %184 : vector<8x1xf32> to vector<8x4xf32>
    %187 = arith.mulf %185, %186 : vector<8x4xf32>
    %cst_69 = arith.constant dense<0.000000e+00> : vector<4xf32>
    %188 = vector.multi_reduction <add>, %187, %cst_69 [0] : vector<8x4xf32> to vector<4xf32>
    %189 = vector.shape_cast %188 : vector<4xf32> to vector<1x4xf32>
    %c600 = arith.constant 600 : index
    %c0_70 = arith.constant 0 : index
    %190 = vector.load %arg5[%c600, %c0_70] : memref<864x4xf32, #tpu.memory_space<vmem>>, vector<1x4xf32>
    %191 = arith.addf %189, %190 : vector<1x4xf32>
    %cst_71 = arith.constant 0.000000e+00 : f32
    %192 = vector.broadcast %cst_71 : f32 to vector<1x4xf32>
    %193 = arith.maximumf %191, %192 : vector<1x4xf32>
    %c608 = arith.constant 608 : index
    %c0_72 = arith.constant 0 : index
    %194 = vector.load %arg5[%c608, %c0_72] : memref<864x4xf32, #tpu.memory_space<vmem>>, vector<16x4xf32>
    %195 = vector.broadcast %193 : vector<1x4xf32> to vector<16x4xf32>
    %196 = arith.mulf %194, %195 : vector<16x4xf32>
    %cst_73 = arith.constant dense<0.000000e+00> : vector<16xf32>
    %197 = vector.multi_reduction <add>, %196, %cst_73 [1] : vector<16x4xf32> to vector<16xf32>
    %198 = vector.shape_cast %197 : vector<16xf32> to vector<16x1xf32>
    %c624 = arith.constant 624 : index
    %c0_74 = arith.constant 0 : index
    %199 = vector.load %arg5[%c624, %c0_74] : memref<864x4xf32, #tpu.memory_space<vmem>>, vector<16x1xf32>
    %200 = arith.addf %198, %199 : vector<16x1xf32>
    %cst_75 = arith.constant 3.000000e+00 : f32
    %201 = vector.broadcast %cst_75 : f32 to vector<16x1xf32>
    %202 = arith.addf %200, %201 : vector<16x1xf32>
    %cst_76 = arith.constant 0.000000e+00 : f32
    %cst_77 = arith.constant 6.000000e+00 : f32
    %203 = vector.broadcast %cst_76 : f32 to vector<16x1xf32>
    %204 = arith.maximumf %203, %202 : vector<16x1xf32>
    %205 = vector.broadcast %cst_77 : f32 to vector<16x1xf32>
    %206 = arith.minimumf %205, %204 : vector<16x1xf32>
    %cst_78 = arith.constant 0.166666672 : f32
    %207 = vector.broadcast %cst_78 : f32 to vector<16x1xf32>
    %208 = arith.mulf %206, %207 : vector<16x1xf32>
    %cst_79 = arith.constant 5.000000e-01 : f32
    %209 = vector.broadcast %cst_79 : f32 to vector<16x1xf32>
    %210 = arith.subf %208, %209 : vector<16x1xf32>
    %cst_80 = arith.constant 4.000000e+00 : f32
    %211 = vector.broadcast %cst_80 : f32 to vector<16x1xf32>
    %212 = arith.mulf %210, %211 : vector<16x1xf32>
    %213 = vector.extract_strided_slice %212 {offsets = [0, 0], sizes = [8, 1], strides = [1, 1]} : vector<16x1xf32> to vector<8x1xf32>
    %cst_81 = arith.constant 1.000000e+00 : f32
    %214 = vector.broadcast %cst_81 : f32 to vector<8x1xf32>
    %215 = arith.addf %213, %214 : vector<8x1xf32>
    %216 = vector.broadcast %215 : vector<8x1xf32> to vector<8x256xf32>
    %217 = arith.mulf %179, %216 : vector<8x256xf32>
    %218 = vector.extract_strided_slice %212 {offsets = [8, 0], sizes = [8, 1], strides = [1, 1]} : vector<16x1xf32> to vector<8x1xf32>
    %cst_82 = arith.constant 0.000000e+00 : f32
    %219 = vector.broadcast %cst_82 : f32 to vector<8x1xf32>
    %220 = arith.addf %218, %219 : vector<8x1xf32>
    %221 = vector.broadcast %220 : vector<8x1xf32> to vector<8x256xf32>
    %222 = arith.mulf %180, %221 : vector<8x256xf32>
    %223 = arith.addf %217, %222 : vector<8x256xf32>
    %cst_83 = arith.constant dense<0.000000e+00> : vector<8xf32>
    %224 = vector.multi_reduction <add>, %223, %cst_83 [1] : vector<8x256xf32> to vector<8xf32>
    %225 = vector.shape_cast %224 : vector<8xf32> to vector<8x1xf32>
    %cst_84 = arith.constant 3.906250e-03 : f32
    %226 = vector.broadcast %cst_84 : f32 to vector<8x1xf32>
    %227 = arith.mulf %225, %226 : vector<8x1xf32>
    %c640 = arith.constant 640 : index
    %c0_85 = arith.constant 0 : index
    %228 = vector.load %arg5[%c640, %c0_85] : memref<864x4xf32, #tpu.memory_space<vmem>>, vector<8x4xf32>
    %229 = vector.broadcast %227 : vector<8x1xf32> to vector<8x4xf32>
    %230 = arith.mulf %228, %229 : vector<8x4xf32>
    %cst_86 = arith.constant dense<0.000000e+00> : vector<4xf32>
    %231 = vector.multi_reduction <add>, %230, %cst_86 [0] : vector<8x4xf32> to vector<4xf32>
    %232 = vector.shape_cast %231 : vector<4xf32> to vector<1x4xf32>
    %c648 = arith.constant 648 : index
    %c0_87 = arith.constant 0 : index
    %233 = vector.load %arg5[%c648, %c0_87] : memref<864x4xf32, #tpu.memory_space<vmem>>, vector<1x4xf32>
    %234 = arith.addf %232, %233 : vector<1x4xf32>
    %cst_88 = arith.constant 0.000000e+00 : f32
    %235 = vector.broadcast %cst_88 : f32 to vector<1x4xf32>
    %236 = arith.maximumf %234, %235 : vector<1x4xf32>
    %c656 = arith.constant 656 : index
    %c0_89 = arith.constant 0 : index
    %237 = vector.load %arg5[%c656, %c0_89] : memref<864x4xf32, #tpu.memory_space<vmem>>, vector<8x4xf32>
    %238 = vector.broadcast %236 : vector<1x4xf32> to vector<8x4xf32>
    %239 = arith.mulf %237, %238 : vector<8x4xf32>
    %cst_90 = arith.constant dense<0.000000e+00> : vector<8xf32>
    %240 = vector.multi_reduction <add>, %239, %cst_90 [1] : vector<8x4xf32> to vector<8xf32>
    %241 = vector.shape_cast %240 : vector<8xf32> to vector<8x1xf32>
    %c664 = arith.constant 664 : index
    %c0_91 = arith.constant 0 : index
    %242 = vector.load %arg5[%c664, %c0_91] : memref<864x4xf32, #tpu.memory_space<vmem>>, vector<8x1xf32>
    %243 = arith.addf %241, %242 : vector<8x1xf32>
    %cst_92 = arith.constant 3.000000e+00 : f32
    %244 = vector.broadcast %cst_92 : f32 to vector<8x1xf32>
    %245 = arith.addf %243, %244 : vector<8x1xf32>
    %cst_93 = arith.constant 0.000000e+00 : f32
    %cst_94 = arith.constant 6.000000e+00 : f32
    %246 = vector.broadcast %cst_93 : f32 to vector<8x1xf32>
    %247 = arith.maximumf %246, %245 : vector<8x1xf32>
    %248 = vector.broadcast %cst_94 : f32 to vector<8x1xf32>
    %249 = arith.minimumf %248, %247 : vector<8x1xf32>
    %cst_95 = arith.constant 0.166666672 : f32
    %250 = vector.broadcast %cst_95 : f32 to vector<8x1xf32>
    %251 = arith.mulf %249, %250 : vector<8x1xf32>
    %252 = vector.broadcast %251 : vector<8x1xf32> to vector<8x256xf32>
    %253 = arith.mulf %223, %252 : vector<8x256xf32>
    %254 = arith.addf %253, %1 : vector<8x256xf32>
    %c0_96 = arith.constant 0 : index
    %c0_97 = arith.constant 0 : index
    %c0_98 = arith.constant 0 : index
    %255 = vector.load %arg6[%c0_96, %c0_97, %c0_98] : memref<1x8x256xf32, #tpu.memory_space<vmem>>, vector<1x8x256xf32>
    %256 = vector.shape_cast %255 : vector<1x8x256xf32> to vector<8x256xf32>
    %257 = vector.shape_cast %254 : vector<8x256xf32> to vector<1x8x256xf32>
    tpu.vector_store %arg6[%c0_96, %c0_97, %c0_98], %257 {strides = array<i32>} : memref<1x8x256xf32, #tpu.memory_space<vmem>>, vector<1x8x256xf32>,
    return
  }
  func.func @transform_0(%arg0: i32) -> (i32, i32, i32) {
    %c0_i32 = arith.constant 0 : i32
    %c0_i32_0 = arith.constant 0 : i32
    %c0_i32_1 = arith.constant 0 : i32
    return %arg0, %c0_i32, %c0_i32_0 : i32, i32, i32
  }
  func.func @transform_1(%arg0: i32) -> (i32, i32) {
    %c0_i32 = arith.constant 0 : i32
    %c0_i32_0 = arith.constant 0 : i32
    %c0_i32_1 = arith.constant 0 : i32
    return %c0_i32, %c0_i32_0 : i32, i32
  }
  func.func @transform_2(%arg0: i32) -> (i32, i32) {
    %c0_i32 = arith.constant 0 : i32
    %c0_i32_0 = arith.constant 0 : i32
    %c0_i32_1 = arith.constant 0 : i32
    return %c0_i32, %c0_i32_0 : i32, i32
  }
  func.func @transform_3(%arg0: i32) -> (i32, i32) {
    %c0_i32 = arith.constant 0 : i32
    %c0_i32_0 = arith.constant 0 : i32
    %c0_i32_1 = arith.constant 0 : i32
    return %c0_i32, %c0_i32_0 : i32, i32
  }
  func.func @transform_4(%arg0: i32) -> (i32, i32) {
    %c0_i32 = arith.constant 0 : i32
    %c0_i32_0 = arith.constant 0 : i32
    %c0_i32_1 = arith.constant 0 : i32
    return %c0_i32, %c0_i32_0 : i32, i32
  }
  func.func @transform_5(%arg0: i32) -> (i32, i32, i32) {
    %c0_i32 = arith.constant 0 : i32
    %c0_i32_0 = arith.constant 0 : i32
    %c0_i32_1 = arith.constant 0 : i32
    return %arg0, %c0_i32, %c0_i32_0 : i32, i32, i32
  }
}

</mosaic_0001>

<llo_original>
// kernel: tpu_custom_call.1
$region0: #{tpu_custom_call.1}
  #allocation0 [shape = 'u32[]', space=smem, size = 0x4, offset = 0x4, fixed_abs, tag = 'smem constant byte address 0x4 - core index']
  #allocation1 [shape = 'u32[72,128]{1,0:T(1,128)}', space=vmem, size = 0x9000, scoped, tag = 'internal scratch']
  %s0 = inlined_call_operand.vmem [shape: f32[2,8,256], index: 0, kind: input, shape index: {}]
  %s1 = inlined_call_operand.vmem [shape: f32[64,8], index: 1, kind: input, shape index: {}]
  %s2 = inlined_call_operand.vmem [shape: f32[32,32], index: 2, kind: input, shape index: {}]
  %s3 = inlined_call_operand.vmem [shape: f32[16,32], index: 3, kind: input, shape index: {}]
  %s4 = inlined_call_operand.vmem [shape: f32[864,4], index: 4, kind: input, shape index: {}]
  %s5 = inlined_call_operand.hbm [shape: f32[2,8,256], index: 5, kind: output, shape index: {}]
  %s6 = sld [smem:[#allocation0]]
  $region53: #{tpu_custom_call.1} parent=0
    _
  %s8 = ssub.s32 1, %s6
  %s9 = scalar_select 0, %s8, %s6
  $region1: #{tpu_custom_call.1} parent=0
    #allocation2 [shape = 'u8[16384]{0}', space=vmem, size = 0x4000, scoped, tag = 'output window, operand 0']
    #allocation3 [shape = 's32[2]{0}', space=sflag, size = 0x8, scoped, tag = 'scoped memory for tpu_custom_call.1']
    %10 = vsyncpa [#allocation3], 0
    %s11 = scalar_lea.sflag [#allocation3], 1
    %12 = vsyncpa %s11, 0
    loop: start=0, step=1, limit=4
    $region2: #{tpu_custom_call.1} parent=1 // loop_pre_header
      _
    $region3: #{tpu_custom_call.1} parent=1 // loop_header
      %s14 = sphi 0, %s18
      %p15 = scmp.ge.s32.totalorder %s14, 4
      %s24 = sphi 0, %s26
      %s27 = sphi 0, %s24
      %s28 = sphi 0, %s27
      %s44 = sphi 0, %s28
      %s48 = sphi 0, %s48
      %s50 = sphi 0, %s48
      %s51 = sphi 0, %s50
      %s65 = sphi 0, %s51
      %s69 = sphi 0, %s69
      %s71 = sphi 0, %s69
      %s72 = sphi 0, %s71
      %s86 = sphi 0, %s72
      %s90 = sphi 0, %s90
      %s92 = sphi 0, %s90
      %s93 = sphi 0, %s92
      %s107 = sphi 0, %s93
      %s111 = sphi 0, %s111
      %s113 = sphi 0, %s111
      %s114 = sphi 0, %s113
      %s128 = sphi 0, %s114
      %s134 = sphi 0, %s136
      %s137 = sphi 0, %s134
      %s138 = sphi 0, %s137
      %s154 = sphi 0, %s138
    $region4: #{tpu_custom_call.1} parent=1 // loop_header_branch
      %17 = sbr.rel (%p15) target = $region8
    $region5: #{tpu_custom_call.1} parent=1 // loop_body
      %s19 = ssub.s32 %s14, 1
      %s20 = ssub.s32 %s14, 2
      %s21 = sadd.s32 %s14, 1
      %s22 = ssub.s32 %s14, %s21
      %p23 = scmp.eq.s32.totalorder %s22, 0
      %s25 = sadd.s32 %s24, 1
      %s26 = scalar_select %p23, %s24, %s25
      %p29 = pneg %p23
      %p30 = scmp.eq.s32.totalorder %s14, 1
      %p31 = por %p29, %p30
      %p32 = scmp.ne.s32.totalorder %s24, %s27
      %p33 = scmp.eq.s32.totalorder %s14, 0
      %p34 = por %p32, %p33
      %p35 = scmp.ne.s32.totalorder %s24, %s27
      %p36 = scmp.eq.s32.totalorder %s19, 1
      %p37 = por %p35, %p36
      %p38 = scmp.ne.s32.totalorder %s27, %s28
      %p39 = scmp.eq.s32.totalorder %s19, 0
      %p40 = por %p38, %p39
      %p41 = scmp.ne.s32.totalorder %s27, %s28
      %p42 = scmp.eq.s32.totalorder %s20, 1
      %p43 = por %p41, %p42
      %p45 = scmp.ne.s32.totalorder %s28, %s44
      %p46 = scmp.eq.s32.totalorder %s20, 0
      %p47 = por %p45, %p46
      %s49 = sadd.s32 %s48, 1
      %p52 = scmp.eq.s32.totalorder %s14, 1
      %p53 = scmp.ne.s32.totalorder %s48, %s50
      %p54 = scmp.eq.s32.totalorder %s14, 0
      %p55 = por %p53, %p54
      %p56 = scmp.ne.s32.totalorder %s48, %s50
      %p57 = scmp.eq.s32.totalorder %s19, 1
      %p58 = por %p56, %p57
      %p59 = scmp.ne.s32.totalorder %s50, %s51
      %p60 = scmp.eq.s32.totalorder %s19, 0
      %p61 = por %p59, %p60
      %p62 = scmp.ne.s32.totalorder %s50, %s51
      %p63 = scmp.eq.s32.totalorder %s20, 1
      %p64 = por %p62, %p63
      %p66 = scmp.ne.s32.totalorder %s51, %s65
      %p67 = scmp.eq.s32.totalorder %s20, 0
      %p68 = por %p66, %p67
      %s70 = sadd.s32 %s69, 1
      %p73 = scmp.eq.s32.totalorder %s14, 1
      %p74 = scmp.ne.s32.totalorder %s69, %s71
      %p75 = scmp.eq.s32.totalorder %s14, 0
      %p76 = por %p74, %p75
      %p77 = scmp.ne.s32.totalorder %s69, %s71
      %p78 = scmp.eq.s32.totalorder %s19, 1
      %p79 = por %p77, %p78
      %p80 = scmp.ne.s32.totalorder %s71, %s72
      %p81 = scmp.eq.s32.totalorder %s19, 0
      %p82 = por %p80, %p81
      %p83 = scmp.ne.s32.totalorder %s71, %s72
      %p84 = scmp.eq.s32.totalorder %s20, 1
      %p85 = por %p83, %p84
      %p87 = scmp.ne.s32.totalorder %s72, %s86
      %p88 = scmp.eq.s32.totalorder %s20, 0
      %p89 = por %p87, %p88
      %s91 = sadd.s32 %s90, 1
      %p94 = scmp.eq.s32.totalorder %s14, 1
      %p95 = scmp.ne.s32.totalorder %s90, %s92
      %p96 = scmp.eq.s32.totalorder %s14, 0
      %p97 = por %p95, %p96
      %p98 = scmp.ne.s32.totalorder %s90, %s92
      %p99 = scmp.eq.s32.totalorder %s19, 1
      %p100 = por %p98, %p99
      %p101 = scmp.ne.s32.totalorder %s92, %s93
      %p102 = scmp.eq.s32.totalorder %s19, 0
      %p103 = por %p101, %p102
      %p104 = scmp.ne.s32.totalorder %s92, %s93
      %p105 = scmp.eq.s32.totalorder %s20, 1
      %p106 = por %p104, %p105
      %p108 = scmp.ne.s32.totalorder %s93, %s107
      %p109 = scmp.eq.s32.totalorder %s20, 0
      %p110 = por %p108, %p109
      %s112 = sadd.s32 %s111, 1
      %p115 = scmp.eq.s32.totalorder %s14, 1
      %p116 = scmp.ne.s32.totalorder %s111, %s113
      %p117 = scmp.eq.s32.totalorder %s14, 0
      %p118 = por %p116, %p117
      %p119 = scmp.ne.s32.totalorder %s111, %s113
      %p120 = scmp.eq.s32.totalorder %s19, 1
      %p121 = por %p119, %p120
      %p122 = scmp.ne.s32.totalorder %s113, %s114
      %p123 = scmp.eq.s32.totalorder %s19, 0
      %p124 = por %p122, %p123
      %p125 = scmp.ne.s32.totalorder %s113, %s114
      %p126 = scmp.eq.s32.totalorder %s20, 1
      %p127 = por %p125, %p126
      %p129 = scmp.ne.s32.totalorder %s114, %s128
      %p130 = scmp.eq.s32.totalorder %s20, 0
      %p131 = por %p129, %p130
      %s132 = ssub.s32 %s14, %s21
      %p133 = scmp.eq.s32.totalorder %s132, 0
      %s135 = sadd.s32 %s134, 1
      %s136 = scalar_select %p133, %s134, %s135
      %p139 = pneg %p133
      %p140 = scmp.eq.s32.totalorder %s14, 1
      %p141 = por %p139, %p140
      %p142 = scmp.ne.s32.totalorder %s134, %s137
      %p143 = scmp.eq.s32.totalorder %s14, 0
      %p144 = por %p142, %p143
      %p145 = scmp.ne.s32.totalorder %s134, %s137
      %p146 = scmp.eq.s32.totalorder %s19, 1
      %p147 = por %p145, %p146
      %p148 = scmp.ne.s32.totalorder %s137, %s138
      %p149 = scmp.eq.s32.totalorder %s19, 0
      %p150 = por %p148, %p149
      %p151 = scmp.ne.s32.totalorder %s137, %s138
      %p152 = scmp.eq.s32.totalorder %s20, 1
      %p153 = por %p151, %p152
      %p155 = scmp.ne.s32.totalorder %s138, %s154
      %p156 = scmp.eq.s32.totalorder %s20, 0
      %p157 = por %p155, %p156
      %p158 = scmp.le.s32.totalorder 1, %s14
      %p159 = scmp.lt.s32.totalorder %s14, 3
      %p160 = pnand %p158, %p159
      %p161 = pneg %p160
      // Predicated region
      $region9: #{tpu_custom_call.1} parent=5 // pred_check
        _
      $region10: #{tpu_custom_call.1} parent=5 // pred_check_branch
        %163 = sbr.rel (%p160) target = $region12
      $region11: #{tpu_custom_call.1} parent=5 // pred_region
        %s164 = ssub.s32 %s14, 1
        // Predicated region
        $region13: #{tpu_custom_call.1} parent=11 // pred_check
          %p165 = pneg %p61
        $region14: #{tpu_custom_call.1} parent=11 // pred_check_branch
          %167 = sbr.rel (%p165) target = $region16
        $region15: #{tpu_custom_call.1} parent=11 // pred_region
          _
        $region16: #{tpu_custom_call.1} parent=11 // pred_fallthru
          _
        // Predicated region
        $region17: #{tpu_custom_call.1} parent=11 // pred_check
          %p168 = pneg %p82
        $region18: #{tpu_custom_call.1} parent=11 // pred_check_branch
          %170 = sbr.rel (%p168) target = $region20
        $region19: #{tpu_custom_call.1} parent=11 // pred_region
          _
        $region20: #{tpu_custom_call.1} parent=11 // pred_fallthru
          _
        // Predicated region
        $region21: #{tpu_custom_call.1} parent=11 // pred_check
          %p171 = pneg %p103
        $region22: #{tpu_custom_call.1} parent=11 // pred_check_branch
          %173 = sbr.rel (%p171) target = $region24
        $region23: #{tpu_custom_call.1} parent=11 // pred_region
          _
        $region24: #{tpu_custom_call.1} parent=11 // pred_fallthru
          _
        // Predicated region
        $region25: #{tpu_custom_call.1} parent=11 // pred_check
          %p174 = pneg %p124
        $region26: #{tpu_custom_call.1} parent=11 // pred_check_branch
          %176 = sbr.rel (%p174) target = $region28
        $region27: #{tpu_custom_call.1} parent=11 // pred_region
          _
        $region28: #{tpu_custom_call.1} parent=11 // pred_fallthru
          _
      $region12: #{tpu_custom_call.1} parent=5 // pred_fallthru
        _
      %p177 = scmp.lt.s32.totalorder %s14, 2
      // Predicated region
      $region29: #{tpu_custom_call.1} parent=5 // pred_check
        %p178 = pneg %p177
      $region30: #{tpu_custom_call.1} parent=5 // pred_check_branch
        %180 = sbr.rel (%p178) target = $region32
      $region31: #{tpu_custom_call.1} parent=5 // pred_region
        // Predicated region
        $region33: #{tpu_custom_call.1} parent=31 // pred_check
          %p181 = pneg %p34
        $region34: #{tpu_custom_call.1} parent=31 // pred_check_branch
          %183 = sbr.rel (%p181) target = $region36
        $region35: #{tpu_custom_call.1} parent=31 // pred_region
          %p184 = scmp.lt.s32.totalorder %s14, 1
          %s185 = scalar_select %p184, %s14, 1
          %s186 = smul.addr %s185, 2
          %s187 = smul.addr %s186, 8
          %s188 = scalar_lea.vmem %s0, %s187
        $region36: #{tpu_custom_call.1} parent=31 // pred_fallthru
          _
      $region32: #{tpu_custom_call.1} parent=5 // pred_fallthru
        _
      %p189 = scmp.le.s32.totalorder 1, %s14
      %p190 = scmp.lt.s32.totalorder %s14, 3
      %p191 = pnand %p189, %p190
      %p192 = pneg %p191
      // Predicated region
      $region37: #{tpu_custom_call.1} parent=5 // pred_check
        _
      $region38: #{tpu_custom_call.1} parent=5 // pred_check_branch
        %194 = sbr.rel (%p191) target = $region40
      $region39: #{tpu_custom_call.1} parent=5 // pred_region
        %s195 = ssub.s32 %s14, 1
        %p196 = scmp.lt.s32.totalorder %s19, 1
        %s197 = scalar_select %p196, %s19, 1
        %s198 = smul.addr %s197, 2
        %s199 = smul.addr %s198, 8
        %s200 = scalar_lea.vmem %s0, %s199
        %p201 = pneg %p40
        %p202 = pneg %p37
        %p203 = pneg %p61
        %p204 = pneg %p58
        %p205 = pneg %p82
        %p206 = pneg %p79
        %p207 = pneg %p103
        %p208 = pneg %p100
        %p209 = pneg %p124
        %p210 = pneg %p121
        %p211 = pneg %p150
        %p212 = pneg %p147
        %s213 = sand.u32 %s137, 1
        %s214 = scalar_lea.sflag [#allocation3], %s213
        %s215 = sand.u32 %s137, 1
        %s216 = smul.addr %s215, 16
        %s217 = scalar_lea.vmem [#allocation2], %s216
        %p218 = scmp.lt.s32.totalorder %s19, 1
        %s219 = scalar_select %p218, %s19, 1
        %s220 = smul.addr %s219, 2
        %s221 = smul.addr %s220, 8
        %s222 = scalar_lea.vmem %s0, %s221
        %v223 = vld [vmem:[%s222] sm:$0xff]
        %v224 = vld [vmem:[%s222 + $0x8] sm:$0xff]
        %v225 = vlaneseq
        %v226 = vand.u32 %v225, 127
        %v227 = vadd.s32 %v226, 128
        %v228 = vshra.s32 %v226, 4
        %v229 = vshra.s32 %v227, 4
        %v230 = vand.u32 %v226, 15
        %v231 = vand.u32 %v227, 15
        %vm232 = vcmp.ge.s32.totalorder %v228, 1
        %vm233 = vcmp.ge.s32.totalorder %v229, 1
        %v234 = vsel %vm232, 1.0, 0.0
        %v235 = vsel %vm233, 1.0, 0.0
        %vm236 = vcmp.le.s32.totalorder %v228, 14
        %vm237 = vcmp.le.s32.totalorder %v229, 14
        %v238 = vsel %vm236, 1.0, 0.0
        %v239 = vsel %vm237, 1.0, 0.0
        %vm240 = vcmp.ge.s32.totalorder %v230, 1
        %vm241 = vcmp.ge.s32.totalorder %v231, 1
        %v242 = vsel %vm240, 1.0, 0.0
        %v243 = vsel %vm241, 1.0, 0.0
        %vm244 = vcmp.le.s32.totalorder %v230, 14
        %vm245 = vcmp.le.s32.totalorder %v231, 14
        %v246 = vsel %vm244, 1.0, 0.0
        %v247 = vsel %vm245, 1.0, 0.0
        %v248 = vld [vmem:[%s1] sm:$0xff]
        %v249 = vld [vmem:[%s1 + $0x8] sm:$0xff]
        %v250 = vld [vmem:[%s1 + $0x10] sm:$0xff]
        %v251 = vld [vmem:[%s1 + $0x18] sm:$0xff]
        %v252 = vld [vmem:[%s1 + $0x20] sm:$0xff]
        %v253 = vld [vmem:[%s1 + $0x28] sm:$0xff]
        %v254 = vld [vmem:[%s1 + $0x30] sm:$0xff]
        %v255 = vld [vmem:[%s1 + $0x38] sm:$0xff]
        %vm256 = vcmask 64512
        %v258 = vsel %vm256, %v248, 0
        %v261 = vsel %vm256, %v249, 0
        %v264 = vsel %vm256, %v250, 0
        %v267 = vsel %vm256, %v251, 0
        %v270 = vsel %vm256, %v252, 0
        %v273 = vsel %vm256, %v253, 0
        %v276 = vsel %vm256, %v254, 0
        %v279 = vsel %vm256, %v255, 0
        %281 = vmatpush.msra.mxu0 0.0
        %282 = vmatpush.msra.mxu0 0.0
        %283 = vmatpush.msra.mxu0 0.0
        %284 = vmatpush.msra.mxu0 0.0
        %285 = vmatpush.msra.mxu0 0.0
        %286 = vmatpush.msra.mxu0 0.0
        %287 = vmatpush.msra.mxu0 0.0
        %288 = vmatpush.msra.mxu0 0.0
        %289 = vmatpush.msra.mxu0 0.0
        %290 = vmatpush.msra.mxu0 0.0
        %291 = vmatpush.msra.mxu0 0.0
        %292 = vmatpush.msra.mxu0 0.0
        %293 = vmatpush.msra.mxu0 0.0
        %294 = vmatpush.msra.mxu0 0.0
        %295 = vmatpush.msra.mxu0 0.0
        %296 = vmatpush.msra.mxu0 %v223
        %297 = vmatmul.f32.gmra.mxu0 %v258
        %v298 = vpop.f32.mrf.mxu0
        %v299 = vadd.f32 0.0, %v298
        %300 = vmatmul.f32.gmra.mxu0 %v261
        %v301 = vpop.f32.mrf.mxu0
        %v302 = vadd.f32 0.0, %v301
        %303 = vmatmul.f32.gmra.mxu0 %v264
        %v304 = vpop.f32.mrf.mxu0
        %v305 = vadd.f32 0.0, %v304
        %306 = vmatmul.f32.gmra.mxu0 %v267
        %v307 = vpop.f32.mrf.mxu0
        %v308 = vadd.f32 0.0, %v307
        %309 = vmatmul.f32.gmra.mxu0 %v270
        %v310 = vpop.f32.mrf.mxu0
        %v311 = vadd.f32 0.0, %v310
        %312 = vmatmul.f32.gmra.mxu0 %v273
        %v313 = vpop.f32.mrf.mxu0
        %v314 = vadd.f32 0.0, %v313
        %315 = vmatmul.f32.gmra.mxu0 %v276
        %v316 = vpop.f32.mrf.mxu0
        %v317 = vadd.f32 0.0, %v316
        %318 = vmatmul.f32.gmra.mxu0 %v279
        %v319 = vpop.f32.mrf.mxu0
        %v320 = vadd.f32 0.0, %v319
        %321 = vdwg.mxu0
        %322 = vmatpush.msra.mxu0 0.0
        %323 = vmatpush.msra.mxu0 0.0
        %324 = vmatpush.msra.mxu0 0.0
        %325 = vmatpush.msra.mxu0 0.0
        %326 = vmatpush.msra.mxu0 0.0
        %327 = vmatpush.msra.mxu0 0.0
        %328 = vmatpush.msra.mxu0 0.0
        %329 = vmatpush.msra.mxu0 0.0
        %330 = vmatpush.msra.mxu0 0.0
        %331 = vmatpush.msra.mxu0 0.0
        %332 = vmatpush.msra.mxu0 0.0
        %333 = vmatpush.msra.mxu0 0.0
        %334 = vmatpush.msra.mxu0 0.0
        %335 = vmatpush.msra.mxu0 0.0
        %336 = vmatpush.msra.mxu0 0.0
        %337 = vmatpush.msra.mxu0 %v224
        %338 = vmatmul.f32.gmra.mxu0 %v258
        %v339 = vpop.f32.mrf.mxu0
        %v340 = vadd.f32 0.0, %v339
        %341 = vmatmul.f32.gmra.mxu0 %v261
        %v342 = vpop.f32.mrf.mxu0
        %v343 = vadd.f32 0.0, %v342
        %344 = vmatmul.f32.gmra.mxu0 %v264
        %v345 = vpop.f32.mrf.mxu0
        %v346 = vadd.f32 0.0, %v345
        %347 = vmatmul.f32.gmra.mxu0 %v267
        %v348 = vpop.f32.mrf.mxu0
        %v349 = vadd.f32 0.0, %v348
        %350 = vmatmul.f32.gmra.mxu0 %v270
        %v351 = vpop.f32.mrf.mxu0
        %v352 = vadd.f32 0.0, %v351
        %353 = vmatmul.f32.gmra.mxu0 %v273
        %v354 = vpop.f32.mrf.mxu0
        %v355 = vadd.f32 0.0, %v354
        %356 = vmatmul.f32.gmra.mxu0 %v276
        %v357 = vpop.f32.mrf.mxu0
        %v358 = vadd.f32 0.0, %v357
        %359 = vmatmul.f32.gmra.mxu0 %v279
        %v360 = vpop.f32.mrf.mxu0
        %v361 = vadd.f32 0.0, %v360
        %362 = vdwg.mxu0
        %v363 = vadd.f32 %v299, %v340
        %364 = vadd.xlane.f32.xlu0 %v363
        %v365 = vpop.xlane.xlu0 %364
        %v366 = vadd.f32 %v302, %v343
        %367 = vadd.xlane.f32.xlu0 %v366
        %v368 = vpop.xlane.xlu0 %367
        %v369 = vadd.f32 %v305, %v346
        %370 = vadd.xlane.f32.xlu0 %v369
        %v371 = vpop.xlane.xlu0 %370
        %v372 = vadd.f32 %v308, %v349
        %373 = vadd.xlane.f32.xlu0 %v372
        %v374 = vpop.xlane.xlu0 %373
        %v375 = vmul.f32 %v365, 0.00390625
        %v376 = vmul.f32 %v368, 0.00390625
        %v377 = vmul.f32 %v371, 0.00390625
        %v378 = vmul.f32 %v374, 0.00390625
        %v379 = vld [vmem:[%s4] sm:$0xff]
        %v380 = vld [vmem:[%s4 + $0x8] sm:$0xff]
        %v381 = vld [vmem:[%s4 + $0x10] sm:$0xff]
        %v382 = vld [vmem:[%s4 + $0x18] sm:$0xff]
        %v383 = vmul.f32 %v379, %v375
        %v384 = vmul.f32 %v380, %v376
        %v385 = vmul.f32 %v381, %v377
        %v386 = vmul.f32 %v382, %v378
        %vm387 = vcmask 31744
        %v388 = vsel %vm387, %v383, 0.0
        %v389 = vsel %vm387, %v384, 0.0
        %v390 = vadd.f32 %v388, %v389
        %v391 = vsel %vm387, %v385, 0.0
        %v392 = vadd.f32 %v390, %v391
        %v393 = vsel %vm387, %v386, 0.0
        %v394 = vadd.f32 %v392, %v393
        %v395 = vrot.slane %v394, 4
        %v396 = vadd.f32 %v394, %v395
        %v397 = vrot.slane %v396, 2
        %v398 = vadd.f32 %v396, %v397
        %v399 = vrot.slane %v398, 1
        %v400 = vadd.f32 %v398, %v399
        %v401 = vld [vmem:[%s4 + $0x20] sm:$0x1]
        %v402 = vadd.f32 %v400, %v401
        %v403 = vmax.f32 %v402, 0.0
        %v404 = vld [vmem:[%s4 + $0x28] sm:$0xff]
        %v405 = vld [vmem:[%s4 + $0x30] sm:$0xff]
        %v406 = vld [vmem:[%s4 + $0x38] sm:$0xff]
        %v407 = vld [vmem:[%s4 + $0x40] sm:$0xff]
        %v408 = vld [vmem:[%s4 + $0x48] sm:$0xff]
        %v409 = vld [vmem:[%s4 + $0x50] sm:$0xff]
        %v410 = vld [vmem:[%s4 + $0x58] sm:$0xff]
        %v411 = vld [vmem:[%s4 + $0x60] sm:$0xff]
        %v412 = vld [vmem:[%s4 + $0x68] sm:$0xff]
        %v413 = vld [vmem:[%s4 + $0x70] sm:$0xff]
        %v414 = vld [vmem:[%s4 + $0x78] sm:$0xff]
        %v415 = vld [vmem:[%s4 + $0x80] sm:$0xff]
        %v416 = vld [vmem:[%s4 + $0x88] sm:$0xff]
        %v417 = vld [vmem:[%s4 + $0x90] sm:$0xff]
        %v418 = vld [vmem:[%s4 + $0x98] sm:$0xff]
        %v419 = vld [vmem:[%s4 + $0xa0] sm:$0xff]
        %v420 = vperm.slane %v403, 0
        %v421 = vmul.f32 %v404, %v420
        %v422 = vmul.f32 %v405, %v420
        %v423 = vmul.f32 %v406, %v420
        %v424 = vmul.f32 %v407, %v420
        %v425 = vmul.f32 %v408, %v420
        %v426 = vmul.f32 %v409, %v420
        %v427 = vmul.f32 %v410, %v420
        %v428 = vmul.f32 %v411, %v420
        %v429 = vmul.f32 %v412, %v420
        %v430 = vmul.f32 %v413, %v420
        %v431 = vmul.f32 %v414, %v420
        %v432 = vmul.f32 %v415, %v420
        %v433 = vmul.f32 %v416, %v420
        %v434 = vmul.f32 %v417, %v420
        %v435 = vmul.f32 %v418, %v420
        %v436 = vmul.f32 %v419, %v420
        %v437 = vsel %vm387, %v421, 0.0
        %438 = vadd.xlane.f32.xlu0 %v437
        %v439 = vpop.xlane.xlu0 %438
        %v440 = vsel %vm387, %v422, 0.0
        %441 = vadd.xlane.f32.xlu0 %v440
        %v442 = vpop.xlane.xlu0 %441
        %v443 = vsel %vm387, %v423, 0.0
        %444 = vadd.xlane.f32.xlu0 %v443
        %v445 = vpop.xlane.xlu0 %444
        %v446 = vsel %vm387, %v424, 0.0
        %447 = vadd.xlane.f32.xlu0 %v446
        %v448 = vpop.xlane.xlu0 %447
        %v449 = vsel %vm387, %v425, 0.0
        %450 = vadd.xlane.f32.xlu0 %v449
        %v451 = vpop.xlane.xlu0 %450
        %v452 = vsel %vm387, %v426, 0.0
        %453 = vadd.xlane.f32.xlu0 %v452
        %v454 = vpop.xlane.xlu0 %453
        %v455 = vsel %vm387, %v427, 0.0
        %456 = vadd.xlane.f32.xlu0 %v455
        %v457 = vpop.xlane.xlu0 %456
        %v458 = vsel %vm387, %v428, 0.0
        %459 = vadd.xlane.f32.xlu0 %v458
        %v460 = vpop.xlane.xlu0 %459
        %v461 = vsel %vm387, %v429, 0.0
        %462 = vadd.xlane.f32.xlu0 %v461
        %v463 = vpop.xlane.xlu0 %462
        %v464 = vsel %vm387, %v430, 0.0
        %465 = vadd.xlane.f32.xlu0 %v464
        %v466 = vpop.xlane.xlu0 %465
        %v467 = vsel %vm387, %v431, 0.0
        %468 = vadd.xlane.f32.xlu0 %v467
        %v469 = vpop.xlane.xlu0 %468
        %v470 = vsel %vm387, %v432, 0.0
        %471 = vadd.xlane.f32.xlu0 %v470
        %v472 = vpop.xlane.xlu0 %471
        %v473 = vsel %vm387, %v433, 0.0
        %474 = vadd.xlane.f32.xlu0 %v473
        %v475 = vpop.xlane.xlu0 %474
        %v476 = vsel %vm387, %v434, 0.0
        %477 = vadd.xlane.f32.xlu0 %v476
        %v478 = vpop.xlane.xlu0 %477
        %v479 = vsel %vm387, %v435, 0.0
        %480 = vadd.xlane.f32.xlu0 %v479
        %v481 = vpop.xlane.xlu0 %480
        %v482 = vsel %vm387, %v436, 0.0
        %483 = vadd.xlane.f32.xlu0 %v482
        %v484 = vpop.xlane.xlu0 %483
        %v485 = vld [vmem:[%s4 + $0xa8] sm:$0xff]
        %v486 = vld [vmem:[%s4 + $0xb0] sm:$0xff]
        %v487 = vld [vmem:[%s4 + $0xb8] sm:$0xff]
        %v488 = vld [vmem:[%s4 + $0xc0] sm:$0xff]
        %v489 = vld [vmem:[%s4 + $0xc8] sm:$0xff]
        %v490 = vld [vmem:[%s4 + $0xd0] sm:$0xff]
        %v491 = vld [vmem:[%s4 + $0xd8] sm:$0xff]
        %v492 = vld [vmem:[%s4 + $0xe0] sm:$0xff]
        %v493 = vld [vmem:[%s4 + $0xe8] sm:$0xff]
        %v494 = vld [vmem:[%s4 + $0xf0] sm:$0xff]
        %v495 = vld [vmem:[%s4 + $0xf8] sm:$0xff]
        %v496 = vld [vmem:[%s4 + $0x100] sm:$0xff]
        %v497 = vld [vmem:[%s4 + $0x108] sm:$0xff]
        %v498 = vld [vmem:[%s4 + $0x110] sm:$0xff]
        %v499 = vld [vmem:[%s4 + $0x118] sm:$0xff]
        %v500 = vld [vmem:[%s4 + $0x120] sm:$0xff]
        %v501 = vadd.f32 %v439, %v485
        %v502 = vadd.f32 %v442, %v486
        %v503 = vadd.f32 %v445, %v487
        %v504 = vadd.f32 %v448, %v488
        %v505 = vadd.f32 %v451, %v489
        %v506 = vadd.f32 %v454, %v490
        %v507 = vadd.f32 %v457, %v491
        %v508 = vadd.f32 %v460, %v492
        %v509 = vadd.f32 %v463, %v493
        %v510 = vadd.f32 %v466, %v494
        %v511 = vadd.f32 %v469, %v495
        %v512 = vadd.f32 %v472, %v496
        %v513 = vadd.f32 %v475, %v497
        %v514 = vadd.f32 %v478, %v498
        %v515 = vadd.f32 %v481, %v499
        %v516 = vadd.f32 %v484, %v500
        %v517 = vadd.f32 %v501, 3.0
        %v518 = vadd.f32 %v502, 3.0
        %v519 = vadd.f32 %v503, 3.0
        %v520 = vadd.f32 %v504, 3.0
        %v521 = vadd.f32 %v505, 3.0
        %v522 = vadd.f32 %v506, 3.0
        %v523 = vadd.f32 %v507, 3.0
        %v524 = vadd.f32 %v508, 3.0
        %v525 = vadd.f32 %v509, 3.0
        %v526 = vadd.f32 %v510, 3.0
        %v527 = vadd.f32 %v511, 3.0
        %v528 = vadd.f32 %v512, 3.0
        %v529 = vadd.f32 %v513, 3.0
        %v530 = vadd.f32 %v514, 3.0
        %v531 = vadd.f32 %v515, 3.0
        %v532 = vadd.f32 %v516, 3.0
        %v533 = vmax.f32 %v517, 0.0
        %v534 = vmax.f32 %v518, 0.0
        %v535 = vmax.f32 %v519, 0.0
        %v536 = vmax.f32 %v520, 0.0
        %v537 = vmax.f32 %v521, 0.0
        %v538 = vmax.f32 %v522, 0.0
        %v539 = vmax.f32 %v523, 0.0
        %v540 = vmax.f32 %v524, 0.0
        %v541 = vmax.f32 %v525, 0.0
        %v542 = vmax.f32 %v526, 0.0
        %v543 = vmax.f32 %v527, 0.0
        %v544 = vmax.f32 %v528, 0.0
        %v545 = vmax.f32 %v529, 0.0
        %v546 = vmax.f32 %v530, 0.0
        %v547 = vmax.f32 %v531, 0.0
        %v548 = vmax.f32 %v532, 0.0
        %v549 = vmin.f32 %v533, 6.0
        %v550 = vmin.f32 %v534, 6.0
        %v551 = vmin.f32 %v535, 6.0
        %v552 = vmin.f32 %v536, 6.0
        %v553 = vmin.f32 %v537, 6.0
        %v554 = vmin.f32 %v538, 6.0
        %v555 = vmin.f32 %v539, 6.0
        %v556 = vmin.f32 %v540, 6.0
        %v557 = vmin.f32 %v541, 6.0
        %v558 = vmin.f32 %v542, 6.0
        %v559 = vmin.f32 %v543, 6.0
        %v560 = vmin.f32 %v544, 6.0
        %v561 = vmin.f32 %v545, 6.0
        %v562 = vmin.f32 %v546, 6.0
        %v563 = vmin.f32 %v547, 6.0
        %v564 = vmin.f32 %v548, 6.0
        %v565 = vmul.f32 %v549, 0.16666667
        %v566 = vmul.f32 %v550, 0.16666667
        %v567 = vmul.f32 %v551, 0.16666667
        %v568 = vmul.f32 %v552, 0.16666667
        %v569 = vmul.f32 %v553, 0.16666667
        %v570 = vmul.f32 %v554, 0.16666667
        %v571 = vmul.f32 %v555, 0.16666667
        %v572 = vmul.f32 %v556, 0.16666667
        %v573 = vmul.f32 %v557, 0.16666667
        %v574 = vmul.f32 %v558, 0.16666667
        %v575 = vmul.f32 %v559, 0.16666667
        %v576 = vmul.f32 %v560, 0.16666667
        %v577 = vmul.f32 %v561, 0.16666667
        %v578 = vmul.f32 %v562, 0.16666667
        %v579 = vmul.f32 %v563, 0.16666667
        %v580 = vmul.f32 %v564, 0.16666667
        %v581 = vsub.f32 %v565, 0.5
        %v582 = vsub.f32 %v566, 0.5
        %v583 = vsub.f32 %v567, 0.5
        %v584 = vsub.f32 %v568, 0.5
        %v585 = vsub.f32 %v569, 0.5
        %v586 = vsub.f32 %v570, 0.5
        %v587 = vsub.f32 %v571, 0.5
        %v588 = vsub.f32 %v572, 0.5
        %v589 = vsub.f32 %v573, 0.5
        %v590 = vsub.f32 %v574, 0.5
        %v591 = vsub.f32 %v575, 0.5
        %v592 = vsub.f32 %v576, 0.5
        %v593 = vsub.f32 %v577, 0.5
        %v594 = vsub.f32 %v578, 0.5
        %v595 = vsub.f32 %v579, 0.5
        %v596 = vsub.f32 %v580, 0.5
        %v597 = vmul.f32 %v581, 4.0
        %v598 = vmul.f32 %v582, 4.0
        %v599 = vmul.f32 %v583, 4.0
        %v600 = vmul.f32 %v584, 4.0
        %v601 = vmul.f32 %v585, 4.0
        %v602 = vmul.f32 %v586, 4.0
        %v603 = vmul.f32 %v587, 4.0
        %v604 = vmul.f32 %v588, 4.0
        %v605 = vmul.f32 %v589, 4.0
        %v606 = vmul.f32 %v590, 4.0
        %v607 = vmul.f32 %v591, 4.0
        %v608 = vmul.f32 %v592, 4.0
        %v609 = vmul.f32 %v593, 4.0
        %v610 = vmul.f32 %v594, 4.0
        %v611 = vmul.f32 %v595, 4.0
        %v612 = vmul.f32 %v596, 4.0
        %v613 = vadd.f32 %v597, 1.0
        %v614 = vadd.f32 %v598, 1.0
        %v615 = vadd.f32 %v599, 1.0
        %v616 = vadd.f32 %v600, 1.0
        %618 = vset.pattern.permute.xlu0 0
        %619 = vperm.xlu0 %618, %v613
        %v620 = vpop.permute.xlu0 %619
        %623 = vset.pattern.permute.xlu0 0
        %624 = vperm.xlu0 %623, %v614
        %v625 = vpop.permute.xlu0 %624
        %628 = vset.pattern.permute.xlu0 0
        %629 = vperm.xlu0 %628, %v615
        %v630 = vpop.permute.xlu0 %629
        %633 = vset.pattern.permute.xlu0 0
        %634 = vperm.xlu0 %633, %v616
        %v635 = vpop.permute.xlu0 %634
        %v637 = vmul.f32 %v299, %v620
        %v638 = vmul.f32 %v340, %v620
        %v639 = vmul.f32 %v302, %v625
        %v640 = vmul.f32 %v343, %v625
        %v641 = vmul.f32 %v305, %v630
        %v642 = vmul.f32 %v346, %v630
        %v643 = vmul.f32 %v308, %v635
        %v644 = vmul.f32 %v349, %v635
        %v645 = vadd.f32 %v601, 0.0
        %v646 = vadd.f32 %v602, 0.0
        %v647 = vadd.f32 %v603, 0.0
        %v648 = vadd.f32 %v604, 0.0
        %650 = vset.pattern.permute.xlu0 0
        %651 = vperm.xlu0 %650, %v645
        %v652 = vpop.permute.xlu0 %651
        %655 = vset.pattern.permute.xlu0 0
        %656 = vperm.xlu0 %655, %v646
        %v657 = vpop.permute.xlu0 %656
        %660 = vset.pattern.permute.xlu0 0
        %661 = vperm.xlu0 %660, %v647
        %v662 = vpop.permute.xlu0 %661
        %665 = vset.pattern.permute.xlu0 0
        %666 = vperm.xlu0 %665, %v648
        %v667 = vpop.permute.xlu0 %666
        %v669 = vmul.f32 %v311, %v652
        %v670 = vmul.f32 %v352, %v652
        %v671 = vmul.f32 %v314, %v657
        %v672 = vmul.f32 %v355, %v657
        %v673 = vmul.f32 %v317, %v662
        %v674 = vmul.f32 %v358, %v662
        %v675 = vmul.f32 %v320, %v667
        %v676 = vmul.f32 %v361, %v667
        %v677 = vadd.f32 %v637, %v669
        %v678 = vadd.f32 %v638, %v670
        %v679 = vadd.f32 %v639, %v671
        %v680 = vadd.f32 %v640, %v672
        %v681 = vadd.f32 %v641, %v673
        %v682 = vadd.f32 %v642, %v674
        %v683 = vadd.f32 %v643, %v675
        %v684 = vadd.f32 %v644, %v676
        %v685 = vadd.f32 %v605, 1.0
        %v686 = vadd.f32 %v606, 1.0
        %v687 = vadd.f32 %v607, 1.0
        %v688 = vadd.f32 %v608, 1.0
        %690 = vset.pattern.permute.xlu0 0
        %691 = vperm.xlu0 %690, %v685
        %v692 = vpop.permute.xlu0 %691
        %695 = vset.pattern.permute.xlu0 0
        %696 = vperm.xlu0 %695, %v686
        %v697 = vpop.permute.xlu0 %696
        %700 = vset.pattern.permute.xlu0 0
        %701 = vperm.xlu0 %700, %v687
        %v702 = vpop.permute.xlu0 %701
        %705 = vset.pattern.permute.xlu0 0
        %706 = vperm.xlu0 %705, %v688
        %v707 = vpop.permute.xlu0 %706
        %v709 = vmul.f32 %v299, %v692
        %v710 = vmul.f32 %v340, %v692
        %v711 = vmul.f32 %v302, %v697
        %v712 = vmul.f32 %v343, %v697
        %v713 = vmul.f32 %v305, %v702
        %v714 = vmul.f32 %v346, %v702
        %v715 = vmul.f32 %v308, %v707
        %v716 = vmul.f32 %v349, %v707
        %v717 = vadd.f32 %v609, 0.0
        %v718 = vadd.f32 %v610, 0.0
        %v719 = vadd.f32 %v611, 0.0
        %v720 = vadd.f32 %v612, 0.0
        %722 = vset.pattern.permute.xlu0 0
        %723 = vperm.xlu0 %722, %v717
        %v724 = vpop.permute.xlu0 %723
        %727 = vset.pattern.permute.xlu0 0
        %728 = vperm.xlu0 %727, %v718
        %v729 = vpop.permute.xlu0 %728
        %732 = vset.pattern.permute.xlu0 0
        %733 = vperm.xlu0 %732, %v719
        %v734 = vpop.permute.xlu0 %733
        %737 = vset.pattern.permute.xlu0 0
        %738 = vperm.xlu0 %737, %v720
        %v739 = vpop.permute.xlu0 %738
        %v741 = vmul.f32 %v311, %v724
        %v742 = vmul.f32 %v352, %v724
        %v743 = vmul.f32 %v314, %v729
        %v744 = vmul.f32 %v355, %v729
        %v745 = vmul.f32 %v317, %v734
        %v746 = vmul.f32 %v358, %v734
        %v747 = vmul.f32 %v320, %v739
        %v748 = vmul.f32 %v361, %v739
        %v749 = vadd.f32 %v709, %v741
        %v750 = vadd.f32 %v710, %v742
        %v751 = vadd.f32 %v711, %v743
        %v752 = vadd.f32 %v712, %v744
        %v753 = vadd.f32 %v713, %v745
        %v754 = vadd.f32 %v714, %v746
        %v755 = vadd.f32 %v715, %v747
        %v756 = vadd.f32 %v716, %v748
        %v757 = vmax.f32 %v677, %v749
        %v758 = vmax.f32 %v678, %v750
        %v759 = vmax.f32 %v679, %v751
        %v760 = vmax.f32 %v680, %v752
        %v761 = vmax.f32 %v681, %v753
        %v762 = vmax.f32 %v682, %v754
        %v763 = vmax.f32 %v683, %v755
        %v764 = vmax.f32 %v684, %v756
        %765 = vrot.lane.b32.xlu0 %v757, 16
        %v766 = vpop.permute.xlu0 %765
        %767 = vrot.lane.b32.xlu0 %v759, 16
        %v768 = vpop.permute.xlu0 %767
        %769 = vrot.lane.b32.xlu0 %v761, 16
        %v770 = vpop.permute.xlu0 %769
        %771 = vrot.lane.b32.xlu0 %v763, 16
        %v772 = vpop.permute.xlu0 %771
        %773 = vrot.lane.b32.xlu0 %v758, 16
        %v774 = vpop.permute.xlu0 %773
        %775 = vrot.lane.b32.xlu0 %v760, 16
        %v776 = vpop.permute.xlu0 %775
        %777 = vrot.lane.b32.xlu0 %v762, 16
        %v778 = vpop.permute.xlu0 %777
        %779 = vrot.lane.b32.xlu0 %v764, 16
        %v780 = vpop.permute.xlu0 %779
        %vm781 = vcmp.lt.s32.totalorder %v226, 16
        %v782 = vsel %vm781, %v766, %v774
        %v783 = vsel %vm781, %v768, %v776
        %v784 = vsel %vm781, %v770, %v778
        %v785 = vsel %vm781, %v772, %v780
        %v786 = vsel %vm781, %v774, %v766
        %v787 = vsel %vm781, %v776, %v768
        %v788 = vsel %vm781, %v778, %v770
        %v789 = vsel %vm781, %v780, %v772
        %v790 = vmul.f32 %v786, %v234
        %v791 = vmul.f32 %v782, %v235
        %v792 = vmul.f32 %v787, %v234
        %v793 = vmul.f32 %v783, %v235
        %v794 = vmul.f32 %v788, %v234
        %v795 = vmul.f32 %v784, %v235
        %v796 = vmul.f32 %v789, %v234
        %v797 = vmul.f32 %v785, %v235
        %798 = vrot.lane.b32.xlu0 %v757, 112
        %v799 = vpop.permute.xlu0 %798
        %800 = vrot.lane.b32.xlu0 %v759, 112
        %v801 = vpop.permute.xlu0 %800
        %802 = vrot.lane.b32.xlu0 %v761, 112
        %v803 = vpop.permute.xlu0 %802
        %804 = vrot.lane.b32.xlu0 %v763, 112
        %v805 = vpop.permute.xlu0 %804
        %806 = vrot.lane.b32.xlu0 %v758, 112
        %v807 = vpop.permute.xlu0 %806
        %808 = vrot.lane.b32.xlu0 %v760, 112
        %v809 = vpop.permute.xlu0 %808
        %810 = vrot.lane.b32.xlu0 %v762, 112
        %v811 = vpop.permute.xlu0 %810
        %812 = vrot.lane.b32.xlu0 %v764, 112
        %v813 = vpop.permute.xlu0 %812
        %vm814 = vcmp.lt.s32.totalorder %v226, 112
        %v815 = vsel %vm814, %v799, %v807
        %v816 = vsel %vm814, %v801, %v809
        %v817 = vsel %vm814, %v803, %v811
        %v818 = vsel %vm814, %v805, %v813
        %v819 = vsel %vm814, %v807, %v799
        %v820 = vsel %vm814, %v809, %v801
        %v821 = vsel %vm814, %v811, %v803
        %v822 = vsel %vm814, %v813, %v805
        %v823 = vmul.f32 %v815, %v238
        %v824 = vmul.f32 %v819, %v239
        %v825 = vmul.f32 %v816, %v238
        %v826 = vmul.f32 %v820, %v239
        %v827 = vmul.f32 %v817, %v238
        %v828 = vmul.f32 %v821, %v239
        %v829 = vmul.f32 %v818, %v238
        %v830 = vmul.f32 %v822, %v239
        %v831 = vld [vmem:[%s4 + $0x2a0] sm:$0xff]
        %v832 = vld [vmem:[%s4 + $0x2a8] sm:$0xff]
        %v833 = vld [vmem:[%s4 + $0x2b0] sm:$0xff]
        %v834 = vld [vmem:[%s4 + $0x2b8] sm:$0xff]
        %836 = vset.pattern.permute.xlu0 0
        %837 = vperm.xlu0 %836, %v831
        %v838 = vpop.permute.xlu0 %837
        %841 = vset.pattern.permute.xlu0 0
        %842 = vperm.xlu0 %841, %v832
        %v843 = vpop.permute.xlu0 %842
        %846 = vset.pattern.permute.xlu0 0
        %847 = vperm.xlu0 %846, %v833
        %v848 = vpop.permute.xlu0 %847
        %851 = vset.pattern.permute.xlu0 0
        %852 = vperm.xlu0 %851, %v834
        %v853 = vpop.permute.xlu0 %852
        %v855 = vmul.f32 %v838, %v790
        %v856 = vmul.f32 %v838, %v791
        %v857 = vmul.f32 %v843, %v792
        %v858 = vmul.f32 %v843, %v793
        %v859 = vmul.f32 %v848, %v794
        %v860 = vmul.f32 %v848, %v795
        %v861 = vmul.f32 %v853, %v796
        %v862 = vmul.f32 %v853, %v797
        %v863 = vld [vmem:[%s4 + $0x2c0] sm:$0xff]
        %v864 = vld [vmem:[%s4 + $0x2c8] sm:$0xff]
        %v865 = vld [vmem:[%s4 + $0x2d0] sm:$0xff]
        %v866 = vld [vmem:[%s4 + $0x2d8] sm:$0xff]
        %868 = vset.pattern.permute.xlu0 0
        %869 = vperm.xlu0 %868, %v863
        %v870 = vpop.permute.xlu0 %869
        %873 = vset.pattern.permute.xlu0 0
        %874 = vperm.xlu0 %873, %v864
        %v875 = vpop.permute.xlu0 %874
        %878 = vset.pattern.permute.xlu0 0
        %879 = vperm.xlu0 %878, %v865
        %v880 = vpop.permute.xlu0 %879
        %883 = vset.pattern.permute.xlu0 0
        %884 = vperm.xlu0 %883, %v866
        %v885 = vpop.permute.xlu0 %884
        %v887 = vmul.f32 %v870, %v757
        %v888 = vmul.f32 %v870, %v758
        %v889 = vmul.f32 %v875, %v759
        %v890 = vmul.f32 %v875, %v760
        %v891 = vmul.f32 %v880, %v761
        %v892 = vmul.f32 %v880, %v762
        %v893 = vmul.f32 %v885, %v763
        %v894 = vmul.f32 %v885, %v764
        %v895 = vadd.f32 %v855, %v887
        %v896 = vadd.f32 %v856, %v888
        %v897 = vadd.f32 %v857, %v889
        %v898 = vadd.f32 %v858, %v890
        %v899 = vadd.f32 %v859, %v891
        %v900 = vadd.f32 %v860, %v892
        %v901 = vadd.f32 %v861, %v893
        %v902 = vadd.f32 %v862, %v894
        %v903 = vld [vmem:[%s4 + $0x2e0] sm:$0xff]
        %v904 = vld [vmem:[%s4 + $0x2e8] sm:$0xff]
        %v905 = vld [vmem:[%s4 + $0x2f0] sm:$0xff]
        %v906 = vld [vmem:[%s4 + $0x2f8] sm:$0xff]
        %908 = vset.pattern.permute.xlu0 0
        %909 = vperm.xlu0 %908, %v903
        %v910 = vpop.permute.xlu0 %909
        %913 = vset.pattern.permute.xlu0 0
        %914 = vperm.xlu0 %913, %v904
        %v915 = vpop.permute.xlu0 %914
        %918 = vset.pattern.permute.xlu0 0
        %919 = vperm.xlu0 %918, %v905
        %v920 = vpop.permute.xlu0 %919
        %923 = vset.pattern.permute.xlu0 0
        %924 = vperm.xlu0 %923, %v906
        %v925 = vpop.permute.xlu0 %924
        %v927 = vmul.f32 %v910, %v823
        %v928 = vmul.f32 %v910, %v824
        %v929 = vmul.f32 %v915, %v825
        %v930 = vmul.f32 %v915, %v826
        %v931 = vmul.f32 %v920, %v827
        %v932 = vmul.f32 %v920, %v828
        %v933 = vmul.f32 %v925, %v829
        %v934 = vmul.f32 %v925, %v830
        %v935 = vadd.f32 %v895, %v927
        %v936 = vadd.f32 %v896, %v928
        %v937 = vadd.f32 %v897, %v929
        %v938 = vadd.f32 %v898, %v930
        %v939 = vadd.f32 %v899, %v931
        %v940 = vadd.f32 %v900, %v932
        %v941 = vadd.f32 %v901, %v933
        %v942 = vadd.f32 %v902, %v934
        %943 = vrot.lane.b32.xlu0 %v935, 1
        %v944 = vpop.permute.xlu0 %943
        %945 = vrot.lane.b32.xlu0 %v937, 1
        %v946 = vpop.permute.xlu0 %945
        %947 = vrot.lane.b32.xlu0 %v939, 1
        %v948 = vpop.permute.xlu0 %947
        %949 = vrot.lane.b32.xlu0 %v941, 1
        %v950 = vpop.permute.xlu0 %949
        %951 = vrot.lane.b32.xlu0 %v936, 1
        %v952 = vpop.permute.xlu0 %951
        %953 = vrot.lane.b32.xlu0 %v938, 1
        %v954 = vpop.permute.xlu0 %953
        %955 = vrot.lane.b32.xlu0 %v940, 1
        %v956 = vpop.permute.xlu0 %955
        %957 = vrot.lane.b32.xlu0 %v942, 1
        %v958 = vpop.permute.xlu0 %957
        %vm959 = vcmp.lt.s32.totalorder %v226, 1
        %v960 = vsel %vm959, %v944, %v952
        %v961 = vsel %vm959, %v946, %v954
        %v962 = vsel %vm959, %v948, %v956
        %v963 = vsel %vm959, %v950, %v958
        %v964 = vsel %vm959, %v952, %v944
        %v965 = vsel %vm959, %v954, %v946
        %v966 = vsel %vm959, %v956, %v948
        %v967 = vsel %vm959, %v958, %v950
        %v968 = vmul.f32 %v964, %v242
        %v969 = vmul.f32 %v960, %v243
        %v970 = vmul.f32 %v965, %v242
        %v971 = vmul.f32 %v961, %v243
        %v972 = vmul.f32 %v966, %v242
        %v973 = vmul.f32 %v962, %v243
        %v974 = vmul.f32 %v967, %v242
        %v975 = vmul.f32 %v963, %v243
        %976 = vrot.lane.b32.xlu0 %v935, 127
        %v977 = vpop.permute.xlu0 %976
        %978 = vrot.lane.b32.xlu0 %v937, 127
        %v979 = vpop.permute.xlu0 %978
        %980 = vrot.lane.b32.xlu0 %v939, 127
        %v981 = vpop.permute.xlu0 %980
        %982 = vrot.lane.b32.xlu0 %v941, 127
        %v983 = vpop.permute.xlu0 %982
        %984 = vrot.lane.b32.xlu0 %v936, 127
        %v985 = vpop.permute.xlu0 %984
        %986 = vrot.lane.b32.xlu0 %v938, 127
        %v987 = vpop.permute.xlu0 %986
        %988 = vrot.lane.b32.xlu0 %v940, 127
        %v989 = vpop.permute.xlu0 %988
        %990 = vrot.lane.b32.xlu0 %v942, 127
        %v991 = vpop.permute.xlu0 %990
        %vm992 = vcmp.lt.s32.totalorder %v226, 127
        %v993 = vsel %vm992, %v977, %v985
        %v994 = vsel %vm992, %v979, %v987
        %v995 = vsel %vm992, %v981, %v989
        %v996 = vsel %vm992, %v983, %v991
        %v997 = vsel %vm992, %v985, %v977
        %v998 = vsel %vm992, %v987, %v979
        %v999 = vsel %vm992, %v989, %v981
        %v1000 = vsel %vm992, %v991, %v983
        %v1001 = vmul.f32 %v993, %v246
        %v1002 = vmul.f32 %v997, %v247
        %v1003 = vmul.f32 %v994, %v246
        %v1004 = vmul.f32 %v998, %v247
        %v1005 = vmul.f32 %v995, %v246
        %v1006 = vmul.f32 %v999, %v247
        %v1007 = vmul.f32 %v996, %v246
        %v1008 = vmul.f32 %v1000, %v247
        %v1009 = vld [vmem:[%s4 + $0x300] sm:$0xff]
        %v1010 = vld [vmem:[%s4 + $0x308] sm:$0xff]
        %v1011 = vld [vmem:[%s4 + $0x310] sm:$0xff]
        %v1012 = vld [vmem:[%s4 + $0x318] sm:$0xff]
        %1014 = vset.pattern.permute.xlu0 0
        %1015 = vperm.xlu0 %1014, %v1009
        %v1016 = vpop.permute.xlu0 %1015
        %1019 = vset.pattern.permute.xlu0 0
        %1020 = vperm.xlu0 %1019, %v1010
        %v1021 = vpop.permute.xlu0 %1020
        %1024 = vset.pattern.permute.xlu0 0
        %1025 = vperm.xlu0 %1024, %v1011
        %v1026 = vpop.permute.xlu0 %1025
        %1029 = vset.pattern.permute.xlu0 0
        %1030 = vperm.xlu0 %1029, %v1012
        %v1031 = vpop.permute.xlu0 %1030
        %v1033 = vmul.f32 %v1016, %v968
        %v1034 = vmul.f32 %v1016, %v969
        %v1035 = vmul.f32 %v1021, %v970
        %v1036 = vmul.f32 %v1021, %v971
        %v1037 = vmul.f32 %v1026, %v972
        %v1038 = vmul.f32 %v1026, %v973
        %v1039 = vmul.f32 %v1031, %v974
        %v1040 = vmul.f32 %v1031, %v975
        %v1041 = vld [vmem:[%s4 + $0x320] sm:$0xff]
        %v1042 = vld [vmem:[%s4 + $0x328] sm:$0xff]
        %v1043 = vld [vmem:[%s4 + $0x330] sm:$0xff]
        %v1044 = vld [vmem:[%s4 + $0x338] sm:$0xff]
        %1046 = vset.pattern.permute.xlu0 0
        %1047 = vperm.xlu0 %1046, %v1041
        %v1048 = vpop.permute.xlu0 %1047
        %1051 = vset.pattern.permute.xlu0 0
        %1052 = vperm.xlu0 %1051, %v1042
        %v1053 = vpop.permute.xlu0 %1052
        %1056 = vset.pattern.permute.xlu0 0
        %1057 = vperm.xlu0 %1056, %v1043
        %v1058 = vpop.permute.xlu0 %1057
        %1061 = vset.pattern.permute.xlu0 0
        %1062 = vperm.xlu0 %1061, %v1044
        %v1063 = vpop.permute.xlu0 %1062
        %v1065 = vmul.f32 %v1048, %v935
        %v1066 = vmul.f32 %v1048, %v936
        %v1067 = vmul.f32 %v1053, %v937
        %v1068 = vmul.f32 %v1053, %v938
        %v1069 = vmul.f32 %v1058, %v939
        %v1070 = vmul.f32 %v1058, %v940
        %v1071 = vmul.f32 %v1063, %v941
        %v1072 = vmul.f32 %v1063, %v942
        %v1073 = vadd.f32 %v1033, %v1065
        %v1074 = vadd.f32 %v1034, %v1066
        %v1075 = vadd.f32 %v1035, %v1067
        %v1076 = vadd.f32 %v1036, %v1068
        %v1077 = vadd.f32 %v1037, %v1069
        %v1078 = vadd.f32 %v1038, %v1070
        %v1079 = vadd.f32 %v1039, %v1071
        %v1080 = vadd.f32 %v1040, %v1072
        %v1081 = vld [vmem:[%s4 + $0x340] sm:$0xff]
        %v1082 = vld [vmem:[%s4 + $0x348] sm:$0xff]
        %v1083 = vld [vmem:[%s4 + $0x350] sm:$0xff]
        %v1084 = vld [vmem:[%s4 + $0x358] sm:$0xff]
        %1086 = vset.pattern.permute.xlu0 0
        %1087 = vperm.xlu0 %1086, %v1081
        %v1088 = vpop.permute.xlu0 %1087
        %1091 = vset.pattern.permute.xlu0 0
        %1092 = vperm.xlu0 %1091, %v1082
        %v1093 = vpop.permute.xlu0 %1092
        %1096 = vset.pattern.permute.xlu0 0
        %1097 = vperm.xlu0 %1096, %v1083
        %v1098 = vpop.permute.xlu0 %1097
        %1101 = vset.pattern.permute.xlu0 0
        %1102 = vperm.xlu0 %1101, %v1084
        %v1103 = vpop.permute.xlu0 %1102
        %v1105 = vmul.f32 %v1088, %v1001
        %v1106 = vmul.f32 %v1088, %v1002
        %v1107 = vmul.f32 %v1093, %v1003
        %v1108 = vmul.f32 %v1093, %v1004
        %v1109 = vmul.f32 %v1098, %v1005
        %v1110 = vmul.f32 %v1098, %v1006
        %v1111 = vmul.f32 %v1103, %v1007
        %v1112 = vmul.f32 %v1103, %v1008
        %v1113 = vadd.f32 %v1073, %v1105
        %v1114 = vadd.f32 %v1074, %v1106
        %v1115 = vadd.f32 %v1075, %v1107
        %v1116 = vadd.f32 %v1076, %v1108
        %v1117 = vadd.f32 %v1077, %v1109
        %v1118 = vadd.f32 %v1078, %v1110
        %v1119 = vadd.f32 %v1079, %v1111
        %v1120 = vadd.f32 %v1080, %v1112
        %v1121 = vld [vmem:[%s2] sm:$0xff]
        %v1122 = vld [vmem:[%s2 + $0x8] sm:$0xff]
        %v1123 = vld [vmem:[%s2 + $0x10] sm:$0xff]
        %v1124 = vld [vmem:[%s2 + $0x18] sm:$0xff]
        %vm1125 = vcmask 261120
        %v1127 = vsel %vm1125, %v1121, 0
        %v1130 = vsel %vm1125, %v1122, 0
        %v1133 = vsel %vm1125, %v1123, 0
        %v1136 = vsel %vm1125, %v1124, 0
        %1138 = vmatpush.msra.mxu0 0.0
        %1139 = vmatpush.msra.mxu0 0.0
        %1140 = vmatpush.msra.mxu0 0.0
        %1141 = vmatpush.msra.mxu0 0.0
        %1142 = vmatpush.msra.mxu0 0.0
        %1143 = vmatpush.msra.mxu0 0.0
        %1144 = vmatpush.msra.mxu0 0.0
        %1145 = vmatpush.msra.mxu0 0.0
        %1146 = vmatpush.msra.mxu0 0.0
        %1147 = vmatpush.msra.mxu0 0.0
        %1148 = vmatpush.msra.mxu0 0.0
        %1149 = vmatpush.msra.mxu0 0.0
        %1150 = vmatpush.msra.mxu0 %v1119
        %1151 = vmatpush.msra.mxu0 %v1117
        %1152 = vmatpush.msra.mxu0 %v1115
        %1153 = vmatpush.msra.mxu0 %v1113
        %1154 = vmatmul.f32.gmra.mxu0 %v1127
        %v1155 = vpop.f32.mrf.mxu0
        %v1156 = vadd.f32 0.0, %v1155
        %1157 = vmatmul.f32.gmra.mxu0 %v1130
        %v1158 = vpop.f32.mrf.mxu0
        %v1159 = vadd.f32 0.0, %v1158
        %1160 = vmatmul.f32.gmra.mxu0 %v1133
        %v1161 = vpop.f32.mrf.mxu0
        %v1162 = vadd.f32 0.0, %v1161
        %1163 = vmatmul.f32.gmra.mxu0 %v1136
        %v1164 = vpop.f32.mrf.mxu0
        %v1165 = vadd.f32 0.0, %v1164
        %1166 = vdwg.mxu0
        %1167 = vmatpush.msra.mxu0 0.0
        %1168 = vmatpush.msra.mxu0 0.0
        %1169 = vmatpush.msra.mxu0 0.0
        %1170 = vmatpush.msra.mxu0 0.0
        %1171 = vmatpush.msra.mxu0 0.0
        %1172 = vmatpush.msra.mxu0 0.0
        %1173 = vmatpush.msra.mxu0 0.0
        %1174 = vmatpush.msra.mxu0 0.0
        %1175 = vmatpush.msra.mxu0 0.0
        %1176 = vmatpush.msra.mxu0 0.0
        %1177 = vmatpush.msra.mxu0 0.0
        %1178 = vmatpush.msra.mxu0 0.0
        %1179 = vmatpush.msra.mxu0 %v1120
        %1180 = vmatpush.msra.mxu0 %v1118
        %1181 = vmatpush.msra.mxu0 %v1116
        %1182 = vmatpush.msra.mxu0 %v1114
        %1183 = vmatmul.f32.gmra.mxu0 %v1127
        %v1184 = vpop.f32.mrf.mxu0
        %v1185 = vadd.f32 0.0, %v1184
        %1186 = vmatmul.f32.gmra.mxu0 %v1130
        %v1187 = vpop.f32.mrf.mxu0
        %v1188 = vadd.f32 0.0, %v1187
        %1189 = vmatmul.f32.gmra.mxu0 %v1133
        %v1190 = vpop.f32.mrf.mxu0
        %v1191 = vadd.f32 0.0, %v1190
        %1192 = vmatmul.f32.gmra.mxu0 %v1136
        %v1193 = vpop.f32.mrf.mxu0
        %v1194 = vadd.f32 0.0, %v1193
        %1195 = vdwg.mxu0
        %v1196 = vadd.f32 %v1113, %v1114
        %1197 = vadd.xlane.f32.xlu0 %v1196
        %v1198 = vpop.xlane.xlu0 %1197
        %v1199 = vadd.f32 %v1115, %v1116
        %1200 = vadd.xlane.f32.xlu0 %v1199
        %v1201 = vpop.xlane.xlu0 %1200
        %v1202 = vadd.f32 %v1117, %v1118
        %1203 = vadd.xlane.f32.xlu0 %v1202
        %v1204 = vpop.xlane.xlu0 %1203
        %v1205 = vadd.f32 %v1119, %v1120
        %1206 = vadd.xlane.f32.xlu0 %v1205
        %v1207 = vpop.xlane.xlu0 %1206
        %v1208 = vmul.f32 %v1198, 0.00390625
        %v1209 = vmul.f32 %v1201, 0.00390625
        %v1210 = vmul.f32 %v1204, 0.00390625
        %v1211 = vmul.f32 %v1207, 0.00390625
        %v1212 = vld [vmem:[%s4 + $0x128] sm:$0xff]
        %v1213 = vld [vmem:[%s4 + $0x130] sm:$0xff]
        %v1214 = vld [vmem:[%s4 + $0x138] sm:$0xff]
        %v1215 = vld [vmem:[%s4 + $0x140] sm:$0xff]
        %v1216 = vmul.f32 %v1212, %v1208
        %v1217 = vmul.f32 %v1213, %v1209
        %v1218 = vmul.f32 %v1214, %v1210
        %v1219 = vmul.f32 %v1215, %v1211
        %v1220 = vsel %vm387, %v1216, 0.0
        %v1221 = vsel %vm387, %v1217, 0.0
        %v1222 = vadd.f32 %v1220, %v1221
        %v1223 = vsel %vm387, %v1218, 0.0
        %v1224 = vadd.f32 %v1222, %v1223
        %v1225 = vsel %vm387, %v1219, 0.0
        %v1226 = vadd.f32 %v1224, %v1225
        %v1227 = vrot.slane %v1226, 4
        %v1228 = vadd.f32 %v1226, %v1227
        %v1229 = vrot.slane %v1228, 2
        %v1230 = vadd.f32 %v1228, %v1229
        %v1231 = vrot.slane %v1230, 1
        %v1232 = vadd.f32 %v1230, %v1231
        %v1233 = vld [vmem:[%s4 + $0x148] sm:$0x1]
        %v1234 = vadd.f32 %v1232, %v1233
        %v1235 = vmax.f32 %v1234, 0.0
        %v1236 = vld [vmem:[%s4 + $0x150] sm:$0xff]
        %v1237 = vld [vmem:[%s4 + $0x158] sm:$0xff]
        %v1238 = vld [vmem:[%s4 + $0x160] sm:$0xff]
        %v1239 = vld [vmem:[%s4 + $0x168] sm:$0xff]
        %v1240 = vld [vmem:[%s4 + $0x170] sm:$0xff]
        %v1241 = vld [vmem:[%s4 + $0x178] sm:$0xff]
        %v1242 = vld [vmem:[%s4 + $0x180] sm:$0xff]
        %v1243 = vld [vmem:[%s4 + $0x188] sm:$0xff]
        %v1244 = vld [vmem:[%s4 + $0x190] sm:$0xff]
        %v1245 = vld [vmem:[%s4 + $0x198] sm:$0xff]
        %v1246 = vld [vmem:[%s4 + $0x1a0] sm:$0xff]
        %v1247 = vld [vmem:[%s4 + $0x1a8] sm:$0xff]
        %v1248 = vld [vmem:[%s4 + $0x1b0] sm:$0xff]
        %v1249 = vld [vmem:[%s4 + $0x1b8] sm:$0xff]
        %v1250 = vld [vmem:[%s4 + $0x1c0] sm:$0xff]
        %v1251 = vld [vmem:[%s4 + $0x1c8] sm:$0xff]
        %v1252 = vperm.slane %v1235, 0
        %v1253 = vmul.f32 %v1236, %v1252
        %v1254 = vmul.f32 %v1237, %v1252
        %v1255 = vmul.f32 %v1238, %v1252
        %v1256 = vmul.f32 %v1239, %v1252
        %v1257 = vmul.f32 %v1240, %v1252
        %v1258 = vmul.f32 %v1241, %v1252
        %v1259 = vmul.f32 %v1242, %v1252
        %v1260 = vmul.f32 %v1243, %v1252
        %v1261 = vmul.f32 %v1244, %v1252
        %v1262 = vmul.f32 %v1245, %v1252
        %v1263 = vmul.f32 %v1246, %v1252
        %v1264 = vmul.f32 %v1247, %v1252
        %v1265 = vmul.f32 %v1248, %v1252
        %v1266 = vmul.f32 %v1249, %v1252
        %v1267 = vmul.f32 %v1250, %v1252
        %v1268 = vmul.f32 %v1251, %v1252
        %v1269 = vsel %vm387, %v1253, 0.0
        %1270 = vadd.xlane.f32.xlu0 %v1269
        %v1271 = vpop.xlane.xlu0 %1270
        %v1272 = vsel %vm387, %v1254, 0.0
        %1273 = vadd.xlane.f32.xlu0 %v1272
        %v1274 = vpop.xlane.xlu0 %1273
        %v1275 = vsel %vm387, %v1255, 0.0
        %1276 = vadd.xlane.f32.xlu0 %v1275
        %v1277 = vpop.xlane.xlu0 %1276
        %v1278 = vsel %vm387, %v1256, 0.0
        %1279 = vadd.xlane.f32.xlu0 %v1278
        %v1280 = vpop.xlane.xlu0 %1279
        %v1281 = vsel %vm387, %v1257, 0.0
        %1282 = vadd.xlane.f32.xlu0 %v1281
        %v1283 = vpop.xlane.xlu0 %1282
        %v1284 = vsel %vm387, %v1258, 0.0
        %1285 = vadd.xlane.f32.xlu0 %v1284
        %v1286 = vpop.xlane.xlu0 %1285
        %v1287 = vsel %vm387, %v1259, 0.0
        %1288 = vadd.xlane.f32.xlu0 %v1287
        %v1289 = vpop.xlane.xlu0 %1288
        %v1290 = vsel %vm387, %v1260, 0.0
        %1291 = vadd.xlane.f32.xlu0 %v1290
        %v1292 = vpop.xlane.xlu0 %1291
        %v1293 = vsel %vm387, %v1261, 0.0
        %1294 = vadd.xlane.f32.xlu0 %v1293
        %v1295 = vpop.xlane.xlu0 %1294
        %v1296 = vsel %vm387, %v1262, 0.0
        %1297 = vadd.xlane.f32.xlu0 %v1296
        %v1298 = vpop.xlane.xlu0 %1297
        %v1299 = vsel %vm387, %v1263, 0.0
        %1300 = vadd.xlane.f32.xlu0 %v1299
        %v1301 = vpop.xlane.xlu0 %1300
        %v1302 = vsel %vm387, %v1264, 0.0
        %1303 = vadd.xlane.f32.xlu0 %v1302
        %v1304 = vpop.xlane.xlu0 %1303
        %v1305 = vsel %vm387, %v1265, 0.0
        %1306 = vadd.xlane.f32.xlu0 %v1305
        %v1307 = vpop.xlane.xlu0 %1306
        %v1308 = vsel %vm387, %v1266, 0.0
        %1309 = vadd.xlane.f32.xlu0 %v1308
        %v1310 = vpop.xlane.xlu0 %1309
        %v1311 = vsel %vm387, %v1267, 0.0
        %1312 = vadd.xlane.f32.xlu0 %v1311
        %v1313 = vpop.xlane.xlu0 %1312
        %v1314 = vsel %vm387, %v1268, 0.0
        %1315 = vadd.xlane.f32.xlu0 %v1314
        %v1316 = vpop.xlane.xlu0 %1315
        %v1317 = vld [vmem:[%s4 + $0x1d0] sm:$0xff]
        %v1318 = vld [vmem:[%s4 + $0x1d8] sm:$0xff]
        %v1319 = vld [vmem:[%s4 + $0x1e0] sm:$0xff]
        %v1320 = vld [vmem:[%s4 + $0x1e8] sm:$0xff]
        %v1321 = vld [vmem:[%s4 + $0x1f0] sm:$0xff]
        %v1322 = vld [vmem:[%s4 + $0x1f8] sm:$0xff]
        %v1323 = vld [vmem:[%s4 + $0x200] sm:$0xff]
        %v1324 = vld [vmem:[%s4 + $0x208] sm:$0xff]
        %v1325 = vld [vmem:[%s4 + $0x210] sm:$0xff]
        %v1326 = vld [vmem:[%s4 + $0x218] sm:$0xff]
        %v1327 = vld [vmem:[%s4 + $0x220] sm:$0xff]
        %v1328 = vld [vmem:[%s4 + $0x228] sm:$0xff]
        %v1329 = vld [vmem:[%s4 + $0x230] sm:$0xff]
        %v1330 = vld [vmem:[%s4 + $0x238] sm:$0xff]
        %v1331 = vld [vmem:[%s4 + $0x240] sm:$0xff]
        %v1332 = vld [vmem:[%s4 + $0x248] sm:$0xff]
        %v1333 = vadd.f32 %v1271, %v1317
        %v1334 = vadd.f32 %v1274, %v1318
        %v1335 = vadd.f32 %v1277, %v1319
        %v1336 = vadd.f32 %v1280, %v1320
        %v1337 = vadd.f32 %v1283, %v1321
        %v1338 = vadd.f32 %v1286, %v1322
        %v1339 = vadd.f32 %v1289, %v1323
        %v1340 = vadd.f32 %v1292, %v1324
        %v1341 = vadd.f32 %v1295, %v1325
        %v1342 = vadd.f32 %v1298, %v1326
        %v1343 = vadd.f32 %v1301, %v1327
        %v1344 = vadd.f32 %v1304, %v1328
        %v1345 = vadd.f32 %v1307, %v1329
        %v1346 = vadd.f32 %v1310, %v1330
        %v1347 = vadd.f32 %v1313, %v1331
        %v1348 = vadd.f32 %v1316, %v1332
        %v1349 = vadd.f32 %v1333, 3.0
        %v1350 = vadd.f32 %v1334, 3.0
        %v1351 = vadd.f32 %v1335, 3.0
        %v1352 = vadd.f32 %v1336, 3.0
        %v1353 = vadd.f32 %v1337, 3.0
        %v1354 = vadd.f32 %v1338, 3.0
        %v1355 = vadd.f32 %v1339, 3.0
        %v1356 = vadd.f32 %v1340, 3.0
        %v1357 = vadd.f32 %v1341, 3.0
        %v1358 = vadd.f32 %v1342, 3.0
        %v1359 = vadd.f32 %v1343, 3.0
        %v1360 = vadd.f32 %v1344, 3.0
        %v1361 = vadd.f32 %v1345, 3.0
        %v1362 = vadd.f32 %v1346, 3.0
        %v1363 = vadd.f32 %v1347, 3.0
        %v1364 = vadd.f32 %v1348, 3.0
        %v1365 = vmax.f32 %v1349, 0.0
        %v1366 = vmax.f32 %v1350, 0.0
        %v1367 = vmax.f32 %v1351, 0.0
        %v1368 = vmax.f32 %v1352, 0.0
        %v1369 = vmax.f32 %v1353, 0.0
        %v1370 = vmax.f32 %v1354, 0.0
        %v1371 = vmax.f32 %v1355, 0.0
        %v1372 = vmax.f32 %v1356, 0.0
        %v1373 = vmax.f32 %v1357, 0.0
        %v1374 = vmax.f32 %v1358, 0.0
        %v1375 = vmax.f32 %v1359, 0.0
        %v1376 = vmax.f32 %v1360, 0.0
        %v1377 = vmax.f32 %v1361, 0.0
        %v1378 = vmax.f32 %v1362, 0.0
        %v1379 = vmax.f32 %v1363, 0.0
        %v1380 = vmax.f32 %v1364, 0.0
        %v1381 = vmin.f32 %v1365, 6.0
        %v1382 = vmin.f32 %v1366, 6.0
        %v1383 = vmin.f32 %v1367, 6.0
        %v1384 = vmin.f32 %v1368, 6.0
        %v1385 = vmin.f32 %v1369, 6.0
        %v1386 = vmin.f32 %v1370, 6.0
        %v1387 = vmin.f32 %v1371, 6.0
        %v1388 = vmin.f32 %v1372, 6.0
        %v1389 = vmin.f32 %v1373, 6.0
        %v1390 = vmin.f32 %v1374, 6.0
        %v1391 = vmin.f32 %v1375, 6.0
        %v1392 = vmin.f32 %v1376, 6.0
        %v1393 = vmin.f32 %v1377, 6.0
        %v1394 = vmin.f32 %v1378, 6.0
        %v1395 = vmin.f32 %v1379, 6.0
        %v1396 = vmin.f32 %v1380, 6.0
        %v1397 = vmul.f32 %v1381, 0.16666667
        %v1398 = vmul.f32 %v1382, 0.16666667
        %v1399 = vmul.f32 %v1383, 0.16666667
        %v1400 = vmul.f32 %v1384, 0.16666667
        %v1401 = vmul.f32 %v1385, 0.16666667
        %v1402 = vmul.f32 %v1386, 0.16666667
        %v1403 = vmul.f32 %v1387, 0.16666667
        %v1404 = vmul.f32 %v1388, 0.16666667
        %v1405 = vmul.f32 %v1389, 0.16666667
        %v1406 = vmul.f32 %v1390, 0.16666667
        %v1407 = vmul.f32 %v1391, 0.16666667
        %v1408 = vmul.f32 %v1392, 0.16666667
        %v1409 = vmul.f32 %v1393, 0.16666667
        %v1410 = vmul.f32 %v1394, 0.16666667
        %v1411 = vmul.f32 %v1395, 0.16666667
        %v1412 = vmul.f32 %v1396, 0.16666667
        %v1413 = vsub.f32 %v1397, 0.5
        %v1414 = vsub.f32 %v1398, 0.5
        %v1415 = vsub.f32 %v1399, 0.5
        %v1416 = vsub.f32 %v1400, 0.5
        %v1417 = vsub.f32 %v1401, 0.5
        %v1418 = vsub.f32 %v1402, 0.5
        %v1419 = vsub.f32 %v1403, 0.5
        %v1420 = vsub.f32 %v1404, 0.5
        %v1421 = vsub.f32 %v1405, 0.5
        %v1422 = vsub.f32 %v1406, 0.5
        %v1423 = vsub.f32 %v1407, 0.5
        %v1424 = vsub.f32 %v1408, 0.5
        %v1425 = vsub.f32 %v1409, 0.5
        %v1426 = vsub.f32 %v1410, 0.5
        %v1427 = vsub.f32 %v1411, 0.5
        %v1428 = vsub.f32 %v1412, 0.5
        %v1429 = vmul.f32 %v1413, 4.0
        %v1430 = vmul.f32 %v1414, 4.0
        %v1431 = vmul.f32 %v1415, 4.0
        %v1432 = vmul.f32 %v1416, 4.0
        %v1433 = vmul.f32 %v1417, 4.0
        %v1434 = vmul.f32 %v1418, 4.0
        %v1435 = vmul.f32 %v1419, 4.0
        %v1436 = vmul.f32 %v1420, 4.0
        %v1437 = vmul.f32 %v1421, 4.0
        %v1438 = vmul.f32 %v1422, 4.0
        %v1439 = vmul.f32 %v1423, 4.0
        %v1440 = vmul.f32 %v1424, 4.0
        %v1441 = vmul.f32 %v1425, 4.0
        %v1442 = vmul.f32 %v1426, 4.0
        %v1443 = vmul.f32 %v1427, 4.0
        %v1444 = vmul.f32 %v1428, 4.0
        %v1445 = vadd.f32 %v1429, 1.0
        %v1446 = vadd.f32 %v1430, 1.0
        %v1447 = vadd.f32 %v1431, 1.0
        %v1448 = vadd.f32 %v1432, 1.0
        %1450 = vset.pattern.permute.xlu0 0
        %1451 = vperm.xlu0 %1450, %v1445
        %v1452 = vpop.permute.xlu0 %1451
        %1455 = vset.pattern.permute.xlu0 0
        %1456 = vperm.xlu0 %1455, %v1446
        %v1457 = vpop.permute.xlu0 %1456
        %1460 = vset.pattern.permute.xlu0 0
        %1461 = vperm.xlu0 %1460, %v1447
        %v1462 = vpop.permute.xlu0 %1461
        %1465 = vset.pattern.permute.xlu0 0
        %1466 = vperm.xlu0 %1465, %v1448
        %v1467 = vpop.permute.xlu0 %1466
        %v1469 = vmul.f32 %v1113, %v1452
        %v1470 = vmul.f32 %v1114, %v1452
        %v1471 = vmul.f32 %v1115, %v1457
        %v1472 = vmul.f32 %v1116, %v1457
        %v1473 = vmul.f32 %v1117, %v1462
        %v1474 = vmul.f32 %v1118, %v1462
        %v1475 = vmul.f32 %v1119, %v1467
        %v1476 = vmul.f32 %v1120, %v1467
        %v1477 = vadd.f32 %v1433, 0.0
        %v1478 = vadd.f32 %v1434, 0.0
        %v1479 = vadd.f32 %v1435, 0.0
        %v1480 = vadd.f32 %v1436, 0.0
        %1482 = vset.pattern.permute.xlu0 0
        %1483 = vperm.xlu0 %1482, %v1477
        %v1484 = vpop.permute.xlu0 %1483
        %1487 = vset.pattern.permute.xlu0 0
        %1488 = vperm.xlu0 %1487, %v1478
        %v1489 = vpop.permute.xlu0 %1488
        %1492 = vset.pattern.permute.xlu0 0
        %1493 = vperm.xlu0 %1492, %v1479
        %v1494 = vpop.permute.xlu0 %1493
        %1497 = vset.pattern.permute.xlu0 0
        %1498 = vperm.xlu0 %1497, %v1480
        %v1499 = vpop.permute.xlu0 %1498
        %v1501 = vmul.f32 %v1156, %v1484
        %v1502 = vmul.f32 %v1185, %v1484
        %v1503 = vmul.f32 %v1159, %v1489
        %v1504 = vmul.f32 %v1188, %v1489
        %v1505 = vmul.f32 %v1162, %v1494
        %v1506 = vmul.f32 %v1191, %v1494
        %v1507 = vmul.f32 %v1165, %v1499
        %v1508 = vmul.f32 %v1194, %v1499
        %v1509 = vadd.f32 %v1469, %v1501
        %v1510 = vadd.f32 %v1470, %v1502
        %v1511 = vadd.f32 %v1471, %v1503
        %v1512 = vadd.f32 %v1472, %v1504
        %v1513 = vadd.f32 %v1473, %v1505
        %v1514 = vadd.f32 %v1474, %v1506
        %v1515 = vadd.f32 %v1475, %v1507
        %v1516 = vadd.f32 %v1476, %v1508
        %v1517 = vadd.f32 %v1437, 1.0
        %v1518 = vadd.f32 %v1438, 1.0
        %v1519 = vadd.f32 %v1439, 1.0
        %v1520 = vadd.f32 %v1440, 1.0
        %1522 = vset.pattern.permute.xlu0 0
        %1523 = vperm.xlu0 %1522, %v1517
        %v1524 = vpop.permute.xlu0 %1523
        %1527 = vset.pattern.permute.xlu0 0
        %1528 = vperm.xlu0 %1527, %v1518
        %v1529 = vpop.permute.xlu0 %1528
        %1532 = vset.pattern.permute.xlu0 0
        %1533 = vperm.xlu0 %1532, %v1519
        %v1534 = vpop.permute.xlu0 %1533
        %1537 = vset.pattern.permute.xlu0 0
        %1538 = vperm.xlu0 %1537, %v1520
        %v1539 = vpop.permute.xlu0 %1538
        %v1541 = vmul.f32 %v1113, %v1524
        %v1542 = vmul.f32 %v1114, %v1524
        %v1543 = vmul.f32 %v1115, %v1529
        %v1544 = vmul.f32 %v1116, %v1529
        %v1545 = vmul.f32 %v1117, %v1534
        %v1546 = vmul.f32 %v1118, %v1534
        %v1547 = vmul.f32 %v1119, %v1539
        %v1548 = vmul.f32 %v1120, %v1539
        %v1549 = vadd.f32 %v1441, 0.0
        %v1550 = vadd.f32 %v1442, 0.0
        %v1551 = vadd.f32 %v1443, 0.0
        %v1552 = vadd.f32 %v1444, 0.0
        %1554 = vset.pattern.permute.xlu0 0
        %1555 = vperm.xlu0 %1554, %v1549
        %v1556 = vpop.permute.xlu0 %1555
        %1559 = vset.pattern.permute.xlu0 0
        %1560 = vperm.xlu0 %1559, %v1550
        %v1561 = vpop.permute.xlu0 %1560
        %1564 = vset.pattern.permute.xlu0 0
        %1565 = vperm.xlu0 %1564, %v1551
        %v1566 = vpop.permute.xlu0 %1565
        %1569 = vset.pattern.permute.xlu0 0
        %1570 = vperm.xlu0 %1569, %v1552
        %v1571 = vpop.permute.xlu0 %1570
        %v1573 = vmul.f32 %v1156, %v1556
        %v1574 = vmul.f32 %v1185, %v1556
        %v1575 = vmul.f32 %v1159, %v1561
        %v1576 = vmul.f32 %v1188, %v1561
        %v1577 = vmul.f32 %v1162, %v1566
        %v1578 = vmul.f32 %v1191, %v1566
        %v1579 = vmul.f32 %v1165, %v1571
        %v1580 = vmul.f32 %v1194, %v1571
        %v1581 = vadd.f32 %v1541, %v1573
        %v1582 = vadd.f32 %v1542, %v1574
        %v1583 = vadd.f32 %v1543, %v1575
        %v1584 = vadd.f32 %v1544, %v1576
        %v1585 = vadd.f32 %v1545, %v1577
        %v1586 = vadd.f32 %v1546, %v1578
        %v1587 = vadd.f32 %v1547, %v1579
        %v1588 = vadd.f32 %v1548, %v1580
        %v1589 = vmax.f32 %v1509, %v1581
        %v1590 = vmax.f32 %v1510, %v1582
        %v1591 = vmax.f32 %v1511, %v1583
        %v1592 = vmax.f32 %v1512, %v1584
        %v1593 = vmax.f32 %v1513, %v1585
        %v1594 = vmax.f32 %v1514, %v1586
        %v1595 = vmax.f32 %v1515, %v1587
        %v1596 = vmax.f32 %v1516, %v1588
        %v1597 = vld [vmem:[%s3] sm:$0xff]
        %v1598 = vld [vmem:[%s3 + $0x8] sm:$0xff]
        %v1600 = vsel %vm1125, %v1597, 0
        %v1603 = vsel %vm1125, %v1598, 0
        %1605 = vmatpush.msra.mxu0 0.0
        %1606 = vmatpush.msra.mxu0 0.0
        %1607 = vmatpush.msra.mxu0 0.0
        %1608 = vmatpush.msra.mxu0 0.0
        %1609 = vmatpush.msra.mxu0 0.0
        %1610 = vmatpush.msra.mxu0 0.0
        %1611 = vmatpush.msra.mxu0 0.0
        %1612 = vmatpush.msra.mxu0 0.0
        %1613 = vmatpush.msra.mxu0 0.0
        %1614 = vmatpush.msra.mxu0 0.0
        %1615 = vmatpush.msra.mxu0 0.0
        %1616 = vmatpush.msra.mxu0 0.0
        %1617 = vmatpush.msra.mxu0 %v1595
        %1618 = vmatpush.msra.mxu0 %v1593
        %1619 = vmatpush.msra.mxu0 %v1591
        %1620 = vmatpush.msra.mxu0 %v1589
        %1621 = vmatmul.f32.gmra.mxu0 %v1600
        %v1622 = vpop.f32.mrf.mxu0
        %v1623 = vadd.f32 0.0, %v1622
        %1624 = vmatmul.f32.gmra.mxu0 %v1603
        %v1625 = vpop.f32.mrf.mxu0
        %v1626 = vadd.f32 0.0, %v1625
        %1627 = vdwg.mxu0
        %1628 = vmatpush.msra.mxu0 0.0
        %1629 = vmatpush.msra.mxu0 0.0
        %1630 = vmatpush.msra.mxu0 0.0
        %1631 = vmatpush.msra.mxu0 0.0
        %1632 = vmatpush.msra.mxu0 0.0
        %1633 = vmatpush.msra.mxu0 0.0
        %1634 = vmatpush.msra.mxu0 0.0
        %1635 = vmatpush.msra.mxu0 0.0
        %1636 = vmatpush.msra.mxu0 0.0
        %1637 = vmatpush.msra.mxu0 0.0
        %1638 = vmatpush.msra.mxu0 0.0
        %1639 = vmatpush.msra.mxu0 0.0
        %1640 = vmatpush.msra.mxu0 %v1596
        %1641 = vmatpush.msra.mxu0 %v1594
        %1642 = vmatpush.msra.mxu0 %v1592
        %1643 = vmatpush.msra.mxu0 %v1590
        %1644 = vmatmul.f32.gmra.mxu0 %v1600
        %v1645 = vpop.f32.mrf.mxu0
        %v1646 = vadd.f32 0.0, %v1645
        %1647 = vmatmul.f32.gmra.mxu0 %v1603
        %v1648 = vpop.f32.mrf.mxu0
        %v1649 = vadd.f32 0.0, %v1648
        %1650 = vdwg.mxu0
        %v1651 = vadd.f32 %v1623, %v1646
        %1652 = vadd.xlane.f32.xlu0 %v1651
        %v1653 = vpop.xlane.xlu0 %1652
        %v1654 = vmul.f32 %v1653, 0.00390625
        %v1655 = vld [vmem:[%s4 + $0x250] sm:$0xff]
        %v1656 = vmul.f32 %v1655, %v1654
        %v1657 = vsel %vm387, %v1656, 0.0
        %v1658 = vrot.slane %v1657, 4
        %v1659 = vadd.f32 %v1657, %v1658
        %v1660 = vrot.slane %v1659, 2
        %v1661 = vadd.f32 %v1659, %v1660
        %v1662 = vrot.slane %v1661, 1
        %v1663 = vadd.f32 %v1661, %v1662
        %v1664 = vld [vmem:[%s4 + $0x258] sm:$0x1]
        %v1665 = vadd.f32 %v1663, %v1664
        %v1666 = vmax.f32 %v1665, 0.0
        %v1667 = vld [vmem:[%s4 + $0x260] sm:$0xff]
        %v1668 = vld [vmem:[%s4 + $0x268] sm:$0xff]
        %v1669 = vperm.slane %v1666, 0
        %v1670 = vmul.f32 %v1667, %v1669
        %v1671 = vmul.f32 %v1668, %v1669
        %v1672 = vsel %vm387, %v1670, 0.0
        %1673 = vadd.xlane.f32.xlu0 %v1672
        %v1674 = vpop.xlane.xlu0 %1673
        %v1675 = vsel %vm387, %v1671, 0.0
        %1676 = vadd.xlane.f32.xlu0 %v1675
        %v1677 = vpop.xlane.xlu0 %1676
        %v1678 = vld [vmem:[%s4 + $0x270] sm:$0xff]
        %v1679 = vld [vmem:[%s4 + $0x278] sm:$0xff]
        %v1680 = vadd.f32 %v1674, %v1678
        %v1681 = vadd.f32 %v1677, %v1679
        %v1682 = vadd.f32 %v1680, 3.0
        %v1683 = vadd.f32 %v1681, 3.0
        %v1684 = vmax.f32 %v1682, 0.0
        %v1685 = vmax.f32 %v1683, 0.0
        %v1686 = vmin.f32 %v1684, 6.0
        %v1687 = vmin.f32 %v1685, 6.0
        %v1688 = vmul.f32 %v1686, 0.16666667
        %v1689 = vmul.f32 %v1687, 0.16666667
        %v1690 = vsub.f32 %v1688, 0.5
        %v1691 = vsub.f32 %v1689, 0.5
        %v1692 = vmul.f32 %v1690, 4.0
        %v1693 = vmul.f32 %v1691, 4.0
        %v1694 = vadd.f32 %v1692, 1.0
        %1696 = vset.pattern.permute.xlu0 0
        %1697 = vperm.xlu0 %1696, %v1694
        %v1698 = vpop.permute.xlu0 %1697
        %v1700 = vmul.f32 %v1623, %v1698
        %v1701 = vmul.f32 %v1646, %v1698
        %v1702 = vadd.f32 %v1693, 0.0
        %1704 = vset.pattern.permute.xlu0 0
        %1705 = vperm.xlu0 %1704, %v1702
        %v1706 = vpop.permute.xlu0 %1705
        %v1708 = vmul.f32 %v1626, %v1706
        %v1709 = vmul.f32 %v1649, %v1706
        %v1710 = vadd.f32 %v1700, %v1708
        %v1711 = vadd.f32 %v1701, %v1709
        %v1712 = vadd.f32 %v1710, %v1711
        %1713 = vadd.xlane.f32.xlu0 %v1712
        %v1714 = vpop.xlane.xlu0 %1713
        %v1715 = vmul.f32 %v1714, 0.00390625
        %v1716 = vld [vmem:[%s4 + $0x280] sm:$0xff]
        %v1717 = vmul.f32 %v1716, %v1715
        %v1718 = vsel %vm387, %v1717, 0.0
        %v1719 = vrot.slane %v1718, 4
        %v1720 = vadd.f32 %v1718, %v1719
        %v1721 = vrot.slane %v1720, 2
        %v1722 = vadd.f32 %v1720, %v1721
        %v1723 = vrot.slane %v1722, 1
        %v1724 = vadd.f32 %v1722, %v1723
        %v1725 = vld [vmem:[%s4 + $0x288] sm:$0x1]
        %v1726 = vadd.f32 %v1724, %v1725
        %v1727 = vmax.f32 %v1726, 0.0
        %v1728 = vld [vmem:[%s4 + $0x290] sm:$0xff]
        %v1729 = vperm.slane %v1727, 0
        %v1730 = vmul.f32 %v1728, %v1729
        %v1731 = vsel %vm387, %v1730, 0.0
        %1732 = vadd.xlane.f32.xlu0 %v1731
        %v1733 = vpop.xlane.xlu0 %1732
        %v1734 = vld [vmem:[%s4 + $0x298] sm:$0xff]
        %v1735 = vadd.f32 %v1733, %v1734
        %v1736 = vadd.f32 %v1735, 3.0
        %v1737 = vmax.f32 %v1736, 0.0
        %v1738 = vmin.f32 %v1737, 6.0
        %v1739 = vmul.f32 %v1738, 0.16666667
        %1741 = vset.pattern.permute.xlu0 0
        %1742 = vperm.xlu0 %1741, %v1739
        %v1743 = vpop.permute.xlu0 %1742
        %v1745 = vmul.f32 %v1710, %v1743
        %v1746 = vmul.f32 %v1711, %v1743
        %v1747 = vadd.f32 %v1745, %v223
        %v1748 = vadd.f32 %v1746, %v224
        %1749 = vst [vmem:[%s217] sm:$0xff] %v1747
        %1750 = vst [vmem:[%s217 + $0x8] sm:$0xff] %v1748
        %s1751 = sand.u32 %s137, 1
        %s1752 = scalar_lea.sflag [#allocation3], %s1751
        %s1753 = sand.u32 %s137, 1
        %s1754 = smul.addr %s1753, 16
        %s1755 = scalar_lea.vmem [#allocation2], %s1754
        // Predicated region
        $region41: #{tpu_custom_call.1} parent=39 // pred_check
          %p1756 = pneg %p147
        $region42: #{tpu_custom_call.1} parent=39 // pred_check_branch
          %1758 = sbr.rel (%p1756) target = $region44
        $region43: #{tpu_custom_call.1} parent=39 // pred_region
          %1760 = vsyncadd %s1752, 0
          %s1761 = smul.addr %s19, 2
          %s1762 = smul.addr %s1761, 8
          %s1763 = scalar_lea.hbm %s5, %s1762
          %s1765 = sshll.u32 %s1755, 4
          %s1766 = int_to_ptr.vmem [resolvable:$true] %s1765
          %s1767 = sshll.u32 %s1763, 4
          %s1768 = int_to_ptr.hbm [resolvable:$true] %s1767
          %1770 = dma.vmem_to_hbm [thread:$0]  %s1766, 256, %s1768, %s1752
        $region44: #{tpu_custom_call.1} parent=39 // pred_fallthru
          _
      $region40: #{tpu_custom_call.1} parent=5 // pred_fallthru
        _
      %p1771 = scmp.le.s32.totalorder 2, %s14
      // Predicated region
      $region45: #{tpu_custom_call.1} parent=5 // pred_check
        %p1772 = pneg %p1771
      $region46: #{tpu_custom_call.1} parent=5 // pred_check_branch
        %1774 = sbr.rel (%p1772) target = $region48
      $region47: #{tpu_custom_call.1} parent=5 // pred_region
        %s1775 = ssub.s32 %s14, 2
        // Predicated region
        $region49: #{tpu_custom_call.1} parent=47 // pred_check
          %p1776 = pneg %p153
        $region50: #{tpu_custom_call.1} parent=47 // pred_check_branch
          %1778 = sbr.rel (%p1776) target = $region52
        $region51: #{tpu_custom_call.1} parent=47 // pred_region
          %s1779 = sand.u32 %s138, 1
          %s1780 = scalar_lea.sflag [#allocation3], %s1779
          %s1781 = sand.u32 %s138, 1
          %s1782 = smul.addr %s1781, 16
          %s1783 = scalar_lea.vmem [#allocation2], %s1782
          %1785 = dma.done %s1780, 256
        $region52: #{tpu_custom_call.1} parent=47 // pred_fallthru
          _
      $region48: #{tpu_custom_call.1} parent=5 // pred_fallthru
        _
    $region6: #{tpu_custom_call.1} parent=1 // loop_footer
      %s18 = sadd.s32 1, %s14
    $region7: #{tpu_custom_call.1} parent=1 // loop_footer_branch
      %13 = sbr.rel target = $region3
    $region8: #{tpu_custom_call.1} parent=1 // loop_exit
      _
    %1786 = vsyncpa [#allocation3], 1
    %s1787 = scalar_lea.sflag [#allocation3], 1
    %1788 = vsyncpa %s1787, 1

</llo_original>
